<compile_context>
chip_gen: v7x
topology: tpu7x:2x2x1
jax: 0.10.0
libtpu: 0.0.40
codegen_flags: <defaults>
</compile_context>

<pallas_src>
import functools
import math

import jax
import jax.numpy as jnp
from jax.experimental import pallas as pl
from jax.experimental.pallas import tpu as pltpu


def _round_up(x, m):
    return (x + m - 1) // m * m


def _leaky_relu(x):
    return jnp.where(x > 0, x, 0.01 * x)      # F.leaky_relu default slope 0.01


def _device_kind():
    try:
        return jax.devices()[0].device_kind.lower()
    except Exception:
        return ""


def _gcn_kernel(s_dst_ref, s_src_ref, m_ref, adj_ref, h_src_ref, base_ref, w_hm_ref,
                out_ref, l_ref, acc_ref, *, exp_dtype):
    """Grid = (dst tiles ["parallel"], src tiles ["arbitrary" softmax reduction])."""
    j = pl.program_id(1)

    @pl.when(j == 0)
    def _init():
        l_ref[...] = jnp.zeros_like(l_ref)
        acc_ref[...] = jnp.zeros_like(acc_ref)

    # e[dst, src] = leaky_relu(a_dst.h_dst + a_src.h_src); (TM,1)+(1,TS) broadcast,
    # pure VPU, no in-kernel transpose.
    e = _leaky_relu(s_dst_ref[...] + s_src_ref[...])
    # m_ref is the exact per-row max of the unmasked scores (precomputed in the wrapper),
    # so e - m <= 0 on every real source column and exp never overflows; no online max /
    # rescale is needed.
    shifted = (e - m_ref[...]).astype(exp_dtype)
    # {0,1} mask applied with a single multiply. int8 -> f32 -> exp_dtype keeps the
    # conversion chain on well-supported lowerings; second cast is a no-op in f32 mode.
    mask = adj_ref[...].astype(jnp.float32).astype(exp_dtype)
    p = jnp.exp(shifted) * mask

    l_ref[...] += jnp.sum(p, axis=1, keepdims=True, dtype=jnp.float32)
    acc_ref[...] += jnp.dot(p.astype(jnp.bfloat16), h_src_ref[...],
                            preferred_element_type=jnp.float32)

    @pl.when(j == pl.num_programs(1) - 1)
    def _finalize():
        # Exact reciprocal (finalize is O(tm) work once per dst tile); the guard keeps
        # zero-in-degree / padded rows finite: acc = 0 there, so hm = 0.
        inv = pl.reciprocal(jnp.maximum(l_ref[...], 1e-30), approx=False)
        hm = acc_ref[...] * inv
        out = jnp.dot(hm, w_hm_ref[...], preferred_element_type=jnp.float32) + base_ref[...]
        out_ref[...] = jnp.maximum(out, 0.0)   # activation = ReLU


@functools.partial(jax.jit, static_argnames=("tile_dst", "tile_src", "compute_dtype"))
def gcn_forward(h, adj, a_src, a_dst, w_h, w_hm, b, *,
                tile_dst=256, tile_src=512, compute_dtype=None):
    """h: (N, Fin), adj: (N, N) {0,1} mask adj[dst, src], a_*: (Fin, 1),
    w_*: (Fin, Fout), b: (1, Fout)."""
    assert tile_dst % 128 == 0 and tile_src % 128 == 0, "tiles must be multiples of 128"
    N, fin = h.shape
    fout = w_hm.shape[1]
    f32 = jnp.float32

    kind = _device_kind()
    is_v7 = ("v7" in kind) or ("7x" in kind)
    if compute_dtype is None:
        # bf16 EUP/VPU exists on v6e/v7x (~2x exp throughput, one fewer cast before the
        # MXU); v5e and unknown chips keep the f32 path.
        compute_dtype = jnp.bfloat16 if (is_v7 or "v6" in kind) else jnp.float32

    # ---- Tile selection & padding --------------------------------------------------
    fin_p = _round_up(fin, 128)     # lane-dense feature dims; sliced off at the end
    fout_p = _round_up(fout, 128)

    n128 = _round_up(N, 128)
    tm = min(tile_dst, n128)
    ts = min(tile_src, n128)
    # Keep >= 2 dst tiles when the graph allows it so the "parallel" axis can be split
    # across TensorCores (v7x has 2 TCs/chip).
    if n128 >= 256:
        tm = min(tm, (n128 // 2) // 128 * 128)
    # Zero-pad N up to a tile multiple (never fall back to a single untiled block).
    Np = _round_up(N, math.lcm(tm, ts))
    # Double-buffered working set at the default (256,512) tiles is well under 48 MiB
    # even for feature dims in the thousands -> safe on v7x (64 MiB/TC); v5e/v6e
    # (128 MiB VMEM) get a higher allowance so larger tiles can be swept in.
    vmem_limit = (48 if is_v7 else 64) * 1024 * 1024
    # NOTE: w_hm has a constant block index; pipeline_mode=pl.Buffered(1) (and
    # Buffered(3) on adj/h_src) are further VMEM/latency knobs for very large Fout/N.

    # ---- XLA prologue: O(N*F) work only; nothing N^2 is materialized here -----------
    h32 = h.astype(f32)
    s_src = h32 @ a_src.astype(f32)                    # (N, 1) node-as-source score
    s_dst = h32 @ a_dst.astype(f32)                    # (N, 1) node-as-destination score
    base = h32 @ w_h.astype(f32) + b.astype(f32)       # (N, Fout) node-apply base

    pad_n = Np - N
    s_dst_p = jnp.pad(s_dst, ((0, pad_n), (0, 0)))
    # Exact per-row max of the unmasked scores (leaky_relu is monotone increasing).
    m_row_p = _leaky_relu(s_dst_p + jnp.max(s_src))    # (Np, 1)
    # Padded source columns get a hugely negative score -> exp underflows to exactly 0
    # (they are also masked by adj = 0).
    s_src_row = jnp.full((1, Np), -1e9, f32).at[0, :N].set(s_src[:, 0])

    adj_i8 = jnp.zeros((Np, Np), jnp.int8).at[:N, :N].set(adj.astype(jnp.int8))
    h_src_bf = jnp.zeros((Np, fin_p), jnp.bfloat16).at[:N, :fin].set(h.astype(jnp.bfloat16))
    base_p = jnp.zeros((Np, fout_p), f32).at[:N, :fout].set(base)
    w_hm_p = jnp.zeros((fin_p, fout_p), f32).at[:fin, :fout].set(w_hm.astype(f32))

    n_i, n_j = Np // tm, Np // ts

    cost = pl.CostEstimate(
        flops=int(2 * Np * Np * fin_p          # alpha @ h (MXU, bf16)
                  + 6 * Np * Np                # leaky_relu / shift / mask / row-sum
                  + 2 * Np * fin_p * fout_p    # hm @ w_hm
                  + 3 * Np * fout_p),          # normalize + base add + relu
        transcendentals=int(Np * Np + Np),     # exp per edge candidate + per-row recip
        bytes_accessed=int(Np * Np * 1                 # adj int8 (streamed once)
                           + n_i * Np * fin_p * 2      # h_src bf16 (re-streamed per dst tile)
                           + n_i * Np * 4              # s_src row (re-streamed per dst tile)
                           + Np * 2 * 4                # s_dst + m_row
                           + 2 * Np * fout_p * 4       # base in + out
                           + fin_p * fout_p * 4),      # w_hm (constant index)
    )

    kernel = functools.partial(_gcn_kernel, exp_dtype=compute_dtype)

    out_p = pl.pallas_call(
        kernel,
        out_shape=jax.ShapeDtypeStruct((Np, fout_p), f32),
        grid_spec=pltpu.PrefetchScalarGridSpec(
            num_scalar_prefetch=0,
            grid=(n_i, n_j),
            in_specs=[
                pl.BlockSpec((tm, 1), lambda i, j: (i, 0)),          # dst scores
                pl.BlockSpec((1, ts), lambda i, j: (0, j)),          # src scores (lane-dense)
                pl.BlockSpec((tm, 1), lambda i, j: (i, 0)),          # per-row softmax max
                pl.BlockSpec((tm, ts), lambda i, j: (i, j)),         # adjacency tile (int8)
                pl.BlockSpec((ts, fin_p), lambda i, j: (j, 0)),      # h_src tile (bf16)
                pl.BlockSpec((tm, fout_p), lambda i, j: (i, 0)),     # precomputed h@w_h + b
                pl.BlockSpec((fin_p, fout_p), lambda i, j: (0, 0)),  # w_hm (constant index)
            ],
            out_specs=pl.BlockSpec((tm, fout_p), lambda i, j: (i, 0)),
            scratch_shapes=[
                pltpu.VMEM((tm, 1), f32),       # softmax denominator
                pltpu.VMEM((tm, fin_p), f32),   # hm accumulator
            ],
        ),
        compiler_params=pltpu.CompilerParams(
            dimension_semantics=("parallel", "arbitrary"),
            vmem_limit_bytes=vmem_limit,
        ),
        cost_estimate=cost,
    )(s_dst_p, s_src_row, m_row_p, adj_i8, h_src_bf, base_p, w_hm_p)

    return out_p[:N, :fout]


def reference_forward(h, adj, a_src, a_dst, w_h, w_hm, b):
    s = h @ a_dst + (h @ a_src).T
    e = jnp.where(s > 0, s, 0.01 * s)
    e = jnp.where(adj > 0, e, -1e30)
    e = e - jnp.max(e, axis=1, keepdims=True)
    p = jnp.exp(e) * adj
    alpha = p / jnp.sum(p, axis=1, keepdims=True)
    hm = alpha @ h
    return jnp.maximum(h @ w_h + hm @ w_hm + b, 0.0)


if __name__ == "__main__":
    N = 500            # pads to 512 -> a real 4 x 2 (dst x src) grid at the demo tile sizes
    in_feats = 4
    out_feats = 8

    key = jax.random.PRNGKey(0)
    k_h, k_a, k_w, k_b = jax.random.split(key, 4)

    # node features
    h = jax.random.normal(k_h, (N, in_feats), dtype=jnp.float32)

    # deterministic graph: self-loops + a directed ring (src -> dst); adj[dst, src]
    adj = jnp.eye(N, dtype=jnp.float32)
    ring = jnp.roll(jnp.eye(N, dtype=jnp.float32), shift=1, axis=1)
    adj = jnp.clip(adj + ring, 0.0, 1.0)

    # attn_fc: Linear(2*in_feats, 1, bias=False); split weight into src/dst halves
    a_full = jax.random.normal(k_a, (2 * in_feats, 1), dtype=jnp.float32) * 0.5
    a_src, a_dst = a_full[:in_feats], a_full[in_feats:]

    # apply_mod.linear: Linear(2*in_feats, out_feats); pre-transposed to (Fin, Fout) halves
    w_full = jax.random.normal(k_w, (2 * in_feats, out_feats), dtype=jnp.float32) * 0.5
    w_h, w_hm = w_full[:in_feats], w_full[in_feats:]
    b = jax.random.normal(k_b, (1, out_feats), dtype=jnp.float32) * 0.1

    # Small demo tiles so the padded 512-node graph exercises multiple dst AND src tiles;
    # production defaults are tile_dst=256, tile_src=512.
    out = gcn_forward(h, adj, a_src, a_dst, w_h, w_hm, b, tile_dst=128, tile_src=256)
    out = jax.block_until_ready(out)

    ref = reference_forward(h, adj, a_src, a_dst, w_h, w_hm, b)
    assert out.shape == (N, out_feats)
    # Tolerance covers the bf16 exp / bf16 MXU aggregation path used on v6e/v7x.
    assert jnp.allclose(out, ref, atol=1e-1, rtol=5e-2), "mismatch vs JAX reference"

    print("KERNEL_OK")
</pallas_src>

<mosaic_0001>
module attributes {stable_mosaic.version = 11 : i64} {
  func.func @_gcn_kernel(%arg0: i32, %arg1: i32, %arg2: memref<128x1xf32, #tpu.memory_space<vmem>>, %arg3: memref<1x256xf32, #tpu.memory_space<vmem>>, %arg4: memref<128x1xf32, #tpu.memory_space<vmem>>, %arg5: memref<128x256xi8, #tpu.memory_space<vmem>>, %arg6: memref<256x128xbf16, #tpu.memory_space<vmem>>, %arg7: memref<128x128xf32, #tpu.memory_space<vmem>>, %arg8: memref<128x128xf32, #tpu.memory_space<vmem>>, %arg9: memref<128x128xf32, #tpu.memory_space<vmem>>, %arg10: memref<128x1xf32, #tpu.memory_space<vmem>>, %arg11: memref<128x128xf32, #tpu.memory_space<vmem>>) attributes {dimension_semantics = [#tpu.dimension_semantics<parallel>, #tpu.dimension_semantics<arbitrary>], iteration_bounds = array<i64: 4, 2>, scalar_prefetch = 0 : i64, scratch_operands = 2 : i64, tpu.core_type = #tpu.core_type<tc>, window_params = [{transform_indices = @transform_0, window_bounds = array<i64: 128, 1>}, {transform_indices = @transform_1, window_bounds = array<i64: 1, 256>}, {transform_indices = @transform_2, window_bounds = array<i64: 128, 1>}, {transform_indices = @transform_3, window_bounds = array<i64: 128, 256>}, {transform_indices = @transform_4, window_bounds = array<i64: 256, 128>}, {transform_indices = @transform_5, window_bounds = array<i64: 128, 128>}, {pipeline_mode = #tpu.pipeline_mode<synchronous>, transform_indices = @transform_6, window_bounds = array<i64: 128, 128>}, {transform_indices = @transform_7, window_bounds = array<i64: 128, 128>}]} {
    %c0_i32 = arith.constant 0 : i32
    %0 = arith.cmpi eq, %arg1, %c0_i32 : i32
    %1 = arith.extui %0 : i1 to i32
    %c0_i32_0 = arith.constant 0 : i32
    %2 = arith.cmpi ne, %1, %c0_i32_0 : i32
    scf.if %2 {
      %cst_22 = arith.constant 0.000000e+00 : f32
      %34 = vector.broadcast %cst_22 : f32 to vector<128x1xf32>
      %c0_23 = arith.constant 0 : index
      %c0_24 = arith.constant 0 : index
      %35 = vector.load %arg10[%c0_23, %c0_24] : memref<128x1xf32, #tpu.memory_space<vmem>>, vector<128x1xf32>
      tpu.vector_store %arg10[%c0_23, %c0_24], %34 {strides = array<i32>} : memref<128x1xf32, #tpu.memory_space<vmem>>, vector<128x1xf32>,
      %cst_25 = arith.constant 0.000000e+00 : f32
      %36 = vector.broadcast %cst_25 : f32 to vector<128x128xf32>
      %c0_26 = arith.constant 0 : index
      %c0_27 = arith.constant 0 : index
      %37 = vector.load %arg11[%c0_26, %c0_27] : memref<128x128xf32, #tpu.memory_space<vmem>>, vector<128x128xf32>
      tpu.vector_store %arg11[%c0_26, %c0_27], %36 {strides = array<i32>} : memref<128x128xf32, #tpu.memory_space<vmem>>, vector<128x128xf32>,
    } else {
    }
    %c0 = arith.constant 0 : index
    %c0_1 = arith.constant 0 : index
    %3 = vector.load %arg2[%c0, %c0_1] : memref<128x1xf32, #tpu.memory_space<vmem>>, vector<128x1xf32>
    %c0_2 = arith.constant 0 : index
    %c0_3 = arith.constant 0 : index
    %4 = vector.load %arg3[%c0_2, %c0_3] : memref<1x256xf32, #tpu.memory_space<vmem>>, vector<1x256xf32>
    %5 = vector.broadcast %3 : vector<128x1xf32> to vector<128x256xf32>
    %6 = vector.broadcast %4 : vector<1x256xf32> to vector<128x256xf32>
    %7 = arith.addf %5, %6 : vector<128x256xf32>
    %cst = arith.constant 0.000000e+00 : f32
    %8 = vector.broadcast %cst : f32 to vector<128x256xf32>
    %9 = arith.cmpf ogt, %7, %8 : vector<128x256xf32>
    %cst_4 = arith.constant 0.00999999977 : f32
    %10 = vector.broadcast %cst_4 : f32 to vector<128x256xf32>
    %11 = arith.mulf %10, %7 : vector<128x256xf32>
    %12 = arith.select %9, %7, %11 : vector<128x256xi1>, vector<128x256xf32>
    %c0_5 = arith.constant 0 : index
    %c0_6 = arith.constant 0 : index
    %13 = vector.load %arg4[%c0_5, %c0_6] : memref<128x1xf32, #tpu.memory_space<vmem>>, vector<128x1xf32>
    %14 = vector.broadcast %13 : vector<128x1xf32> to vector<128x256xf32>
    %15 = arith.subf %12, %14 : vector<128x256xf32>
    %c0_7 = arith.constant 0 : index
    %c0_8 = arith.constant 0 : index
    %16 = vector.load %arg5[%c0_7, %c0_8] : memref<128x256xi8, #tpu.memory_space<vmem>>, vector<128x256xi8>
    %17 = arith.sitofp %16 : vector<128x256xi8> to vector<128x256xf32>
    %18 = math.exp %15 : vector<128x256xf32>
    %19 = arith.mulf %18, %17 : vector<128x256xf32>
    %c0_9 = arith.constant 0 : index
    %c0_10 = arith.constant 0 : index
    %20 = vector.load %arg10[%c0_9, %c0_10] : memref<128x1xf32, #tpu.memory_space<vmem>>, vector<128x1xf32>
    %cst_11 = arith.constant dense<0.000000e+00> : vector<128xf32>
    %21 = vector.multi_reduction <add>, %19, %cst_11 [1] : vector<128x256xf32> to vector<128xf32>
    %22 = vector.shape_cast %21 : vector<128xf32> to vector<128x1xf32>
    %23 = arith.addf %20, %22 : vector<128x1xf32>
    %c0_12 = arith.constant 0 : index
    %c0_13 = arith.constant 0 : index
    %24 = vector.load %arg10[%c0_12, %c0_13] : memref<128x1xf32, #tpu.memory_space<vmem>>, vector<128x1xf32>
    tpu.vector_store %arg10[%c0_12, %c0_13], %23 {strides = array<i32>} : memref<128x1xf32, #tpu.memory_space<vmem>>, vector<128x1xf32>,
    %c0_14 = arith.constant 0 : index
    %c0_15 = arith.constant 0 : index
    %25 = vector.load %arg11[%c0_14, %c0_15] : memref<128x128xf32, #tpu.memory_space<vmem>>, vector<128x128xf32>
    %26 = arith.truncf %19 : vector<128x256xf32> to vector<128x256xbf16>
    %c0_16 = arith.constant 0 : index
    %c0_17 = arith.constant 0 : index
    %27 = vector.load %arg6[%c0_16, %c0_17] : memref<256x128xbf16, #tpu.memory_space<vmem>>, vector<256x128xbf16>
    %cst_18 = arith.constant dense<0.000000e+00> : vector<128x128xf32>
    %28 = tpu.matmul %26, %27, %cst_18 {dimension_numbers = #tpu.dot_dimension_numbers<[1], [0], [0], [1], [0, 0, 1, 1], [], []>} : vector<128x256xbf16>, vector<256x128xbf16>, vector<128x128xf32> -> vector<128x128xf32>
    %29 = arith.addf %25, %28 : vector<128x128xf32>
    %c0_19 = arith.constant 0 : index
    %c0_20 = arith.constant 0 : index
    %30 = vector.load %arg11[%c0_19, %c0_20] : memref<128x128xf32, #tpu.memory_space<vmem>>, vector<128x128xf32>
    tpu.vector_store %arg11[%c0_19, %c0_20], %29 {strides = array<i32>} : memref<128x128xf32, #tpu.memory_space<vmem>>, vector<128x128xf32>,
    %c1_i32 = arith.constant 1 : i32
    %31 = arith.cmpi eq, %arg1, %c1_i32 : i32
    %32 = arith.extui %31 : i1 to i32
    %c0_i32_21 = arith.constant 0 : i32
    %33 = arith.cmpi ne, %32, %c0_i32_21 : i32
    scf.if %33 {
      %c0_22 = arith.constant 0 : index
      %c0_23 = arith.constant 0 : index
      %34 = vector.load %arg10[%c0_22, %c0_23] : memref<128x1xf32, #tpu.memory_space<vmem>>, vector<128x1xf32>
      %cst_24 = arith.constant 1.000000e-30 : f32
      %35 = vector.broadcast %cst_24 : f32 to vector<128x1xf32>
      %36 = arith.maximumf %34, %35 : vector<128x1xf32>
      %37 = tpu.reciprocal %36 : vector<128x1xf32> -> vector<128x1xf32>
      %c0_25 = arith.constant 0 : index
      %c0_26 = arith.constant 0 : index
      %38 = vector.load %arg11[%c0_25, %c0_26] : memref<128x128xf32, #tpu.memory_space<vmem>>, vector<128x128xf32>
      %39 = vector.broadcast %37 : vector<128x1xf32> to vector<128x128xf32>
      %40 = arith.mulf %38, %39 : vector<128x128xf32>
      %c0_27 = arith.constant 0 : index
      %c0_28 = arith.constant 0 : index
      %41 = vector.load %arg8[%c0_27, %c0_28] : memref<128x128xf32, #tpu.memory_space<vmem>>, vector<128x128xf32>
      %cst_29 = arith.constant dense<0.000000e+00> : vector<128x128xf32>
      %42 = tpu.matmul %40, %41, %cst_29 {dimension_numbers = #tpu.dot_dimension_numbers<[1], [0], [0], [1], [0, 0, 1, 1], [], []>} : vector<128x128xf32>, vector<128x128xf32>, vector<128x128xf32> -> vector<128x128xf32>
      %c0_30 = arith.constant 0 : index
      %c0_31 = arith.constant 0 : index
      %43 = vector.load %arg7[%c0_30, %c0_31] : memref<128x128xf32, #tpu.memory_space<vmem>>, vector<128x128xf32>
      %44 = arith.addf %42, %43 : vector<128x128xf32>
      %cst_32 = arith.constant 0.000000e+00 : f32
      %45 = vector.broadcast %cst_32 : f32 to vector<128x128xf32>
      %46 = arith.maximumf %44, %45 : vector<128x128xf32>
      %c0_33 = arith.constant 0 : index
      %c0_34 = arith.constant 0 : index
      %47 = vector.load %arg9[%c0_33, %c0_34] : memref<128x128xf32, #tpu.memory_space<vmem>>, vector<128x128xf32>
      tpu.vector_store %arg9[%c0_33, %c0_34], %46 {strides = array<i32>} : memref<128x128xf32, #tpu.memory_space<vmem>>, vector<128x128xf32>,
    } else {
    }
    return
  }
  func.func @transform_0(%arg0: i32, %arg1: i32) -> (i32, i32) {
    %c0_i32 = arith.constant 0 : i32
    %c0_i32_0 = arith.constant 0 : i32
    return %arg0, %c0_i32 : i32, i32
  }
  func.func @transform_1(%arg0: i32, %arg1: i32) -> (i32, i32) {
    %c0_i32 = arith.constant 0 : i32
    %c0_i32_0 = arith.constant 0 : i32
    return %c0_i32, %arg1 : i32, i32
  }
  func.func @transform_2(%arg0: i32, %arg1: i32) -> (i32, i32) {
    %c0_i32 = arith.constant 0 : i32
    %c0_i32_0 = arith.constant 0 : i32
    return %arg0, %c0_i32 : i32, i32
  }
  func.func @transform_3(%arg0: i32, %arg1: i32) -> (i32, i32) {
    %c0_i32 = arith.constant 0 : i32
    return %arg0, %arg1 : i32, i32
  }
  func.func @transform_4(%arg0: i32, %arg1: i32) -> (i32, i32) {
    %c0_i32 = arith.constant 0 : i32
    %c0_i32_0 = arith.constant 0 : i32
    return %arg1, %c0_i32 : i32, i32
  }
  func.func @transform_5(%arg0: i32, %arg1: i32) -> (i32, i32) {
    %c0_i32 = arith.constant 0 : i32
    %c0_i32_0 = arith.constant 0 : i32
    return %arg0, %c0_i32 : i32, i32
  }
  func.func @transform_6(%arg0: i32, %arg1: i32) -> (i32, i32) {
    %c0_i32 = arith.constant 0 : i32
    %c0_i32_0 = arith.constant 0 : i32
    %c0_i32_1 = arith.constant 0 : i32
    return %c0_i32, %c0_i32_0 : i32, i32
  }
  func.func @transform_7(%arg0: i32, %arg1: i32) -> (i32, i32) {
    %c0_i32 = arith.constant 0 : i32
    %c0_i32_0 = arith.constant 0 : i32
    return %arg0, %c0_i32 : i32, i32
  }
}

</mosaic_0001>

<llo_original>
// kernel: gcn_forward.1
$region0: #{gcn_forward.1}
  #allocation0 [shape = 'u32[]', space=smem, size = 0x4, offset = 0x4, fixed_abs, tag = 'smem constant byte address 0x4 - core index']
  #allocation1 [shape = 'u32[144,128]{1,0:T(1,128)}', space=vmem, size = 0x12000, scoped, tag = 'internal scratch']
  #allocation2 [shape = 'f32[128,1]{1,0:T(8,128)}', space=vmem, size = 0x10000, scoped, tag = 'scratch operand']
  #allocation3 [shape = 'f32[128,128]{1,0:T(8,128)}', space=vmem, size = 0x10000, scoped, tag = 'scratch operand']
  %s0 = inlined_call_operand.hbm [shape: f32[512,1], index: 0, kind: input, shape index: {}]
  %s1 = inlined_call_operand.hbm [shape: f32[1,512], index: 1, kind: input, shape index: {}]
  %s2 = inlined_call_operand.hbm [shape: f32[512,1], index: 2, kind: input, shape index: {}]
  %s3 = inlined_call_operand.hbm [shape: s8[512,512], index: 3, kind: input, shape index: {}]
  %s4 = inlined_call_operand.hbm [shape: bf16[512,128], index: 4, kind: input, shape index: {}]
  %s5 = inlined_call_operand.hbm [shape: f32[512,128], index: 5, kind: input, shape index: {}]
  %s6 = inlined_call_operand.hbm [shape: f32[128,128], index: 6, kind: input, shape index: {}]
  %s7 = inlined_call_operand.hbm [shape: f32[512,128], index: 7, kind: output, shape index: {}]
  %s8 = sld [smem:[#allocation0]]
  $region97: #{gcn_forward.1} parent=0
    _
  %s10 = ssub.s32 1, %s8
  %s11 = scalar_select 0, %s10, %s8
  $region1: #{gcn_forward.1} parent=0
    #allocation4 [shape = 'u8[131072]{0}', space=vmem, size = 0x20000, scoped, tag = 'input window, operand 0']
    #allocation5 [shape = 's32[2]{0}', space=sflag, size = 0x8, scoped, tag = 'scoped memory for gcn_forward.1']
    #allocation6 [shape = 's32[2]{0}', space=sflag, size = 0x8, scoped, tag = 'scoped memory for gcn_forward.1']
    #allocation7 [shape = 'u8[2048]{0}', space=vmem, size = 0x800, scoped, tag = 'input window, operand 1']
    #allocation8 [shape = 's32[2]{0}', space=sflag, size = 0x8, scoped, tag = 'scoped memory for gcn_forward.1']
    #allocation9 [shape = 'u8[131072]{0}', space=vmem, size = 0x20000, scoped, tag = 'input window, operand 2']
    #allocation10 [shape = 'u8[65536]{0}', space=vmem, size = 0x10000, scoped, tag = 'input window, operand 3']
    #allocation11 [shape = 's32[2]{0}', space=sflag, size = 0x8, scoped, tag = 'scoped memory for gcn_forward.1']
    #allocation12 [shape = 'u8[131072]{0}', space=vmem, size = 0x20000, scoped, tag = 'input window, operand 4']
    #allocation13 [shape = 'u8[131072]{0}', space=vmem, size = 0x20000, scoped, tag = 'input window, operand 5']
    #allocation14 [shape = 's32[2]{0}', space=sflag, size = 0x8, scoped, tag = 'scoped memory for gcn_forward.1']
    #allocation15 [shape = 'u8[65536]{0}', space=vmem, size = 0x10000, scoped, tag = 'input window, operand 6, single buffered']
    #allocation16 [shape = 'u8[131072]{0}', space=vmem, size = 0x20000, scoped, tag = 'output window, operand 0']
    %12 = vsyncpa [#allocation5], 0
    %s13 = scalar_lea.sflag [#allocation5], 1
    %14 = vsyncpa %s13, 0
    %15 = vsyncpa [#allocation8], 0
    %s16 = scalar_lea.sflag [#allocation8], 1
    %17 = vsyncpa %s16, 0
    %18 = vsyncpa [#allocation11], 0
    %s19 = scalar_lea.sflag [#allocation11], 1
    %20 = vsyncpa %s19, 0
    %21 = vsyncpa [#allocation14], 0
    %s22 = scalar_lea.sflag [#allocation14], 1
    %23 = vsyncpa %s22, 0
    %24 = vsyncpa [#allocation6], 0
    %s25 = scalar_lea.sflag [#allocation6], 1
    %26 = vsyncpa %s25, 0
    loop: start=0, step=1, limit=10
    $region2: #{gcn_forward.1} parent=1 // loop_pre_header
      _
    $region3: #{gcn_forward.1} parent=1 // loop_header
      %s28 = sphi 0, %s32
      %p29 = scmp.ge.s32.totalorder %s28, 10
      %s35 = sphi 0, %s47
      %s36 = sphi 0, %s43
      %s37 = sphi 0, %s35
      %s38 = sphi 0, %s36
      %s39 = sphi 0, %s37
      %s40 = sphi 0, %s38
      %s50 = sphi 0, %s52
      %s53 = sphi 0, %s50
      %s54 = sphi 0, %s53
      %s70 = sphi 0, %s54
      %s76 = sphi 0, %s78
      %s79 = sphi 0, %s76
      %s80 = sphi 0, %s79
      %s96 = sphi 0, %s80
      %s102 = sphi 0, %s104
      %s105 = sphi 0, %s102
      %s106 = sphi 0, %s105
      %s122 = sphi 0, %s106
      %s130 = sphi 0, %s132
      %s133 = sphi 0, %s130
      %s134 = sphi 0, %s133
      %s150 = sphi 0, %s134
      %s156 = sphi 0, %s158
      %s159 = sphi 0, %s156
      %s160 = sphi 0, %s159
      %s176 = sphi 0, %s160
      %s182 = sphi 0, %s184
      %s185 = sphi 0, %s182
      %s186 = sphi 0, %s185
      %s202 = sphi 0, %s186
      %s206 = sphi 0, %s206
      %s208 = sphi 0, %s206
      %s209 = sphi 0, %s208
      %s223 = sphi 0, %s209
      %s229 = sphi 0, %s231
      %s232 = sphi 0, %s229
      %s233 = sphi 0, %s232
      %s249 = sphi 0, %s233
    $region4: #{gcn_forward.1} parent=1 // loop_header_branch
      %31 = sbr.rel (%p29) target = $region8
    $region5: #{gcn_forward.1} parent=1 // loop_body
      %s33 = ssub.s32 %s28, 1
      %s34 = ssub.s32 %s28, 2
      %s41 = sadd.s32 1, %s36
      %p42 = scmp.ge.s32.totalorder %s41, 2
      %s43 = scalar_select %p42, 0, %s41
      %s44 = sadd.s32 1, %s35
      %s45 = scalar_select %p42, %s44, %s35
      %p46 = scmp.ge.s32.totalorder %s45, 4
      %s47 = scalar_select %p46, 0, %s45
      %s48 = ssub.s32 %s35, %s47
      %p49 = scmp.eq.s32.totalorder %s48, 0
      %s51 = sadd.s32 %s50, 1
      %s52 = scalar_select %p49, %s50, %s51
      %p55 = pneg %p49
      %p56 = scmp.eq.s32.totalorder %s28, 7
      %p57 = por %p55, %p56
      %p58 = scmp.ne.s32.totalorder %s50, %s53
      %p59 = scmp.eq.s32.totalorder %s28, 0
      %p60 = por %p58, %p59
      %p61 = scmp.ne.s32.totalorder %s50, %s53
      %p62 = scmp.eq.s32.totalorder %s33, 7
      %p63 = por %p61, %p62
      %p64 = scmp.ne.s32.totalorder %s53, %s54
      %p65 = scmp.eq.s32.totalorder %s33, 0
      %p66 = por %p64, %p65
      %p67 = scmp.ne.s32.totalorder %s53, %s54
      %p68 = scmp.eq.s32.totalorder %s34, 7
      %p69 = por %p67, %p68
      %p71 = scmp.ne.s32.totalorder %s54, %s70
      %p72 = scmp.eq.s32.totalorder %s34, 0
      %p73 = por %p71, %p72
      %s74 = ssub.s32 %s36, %s43
      %p75 = scmp.eq.s32.totalorder %s74, 0
      %s77 = sadd.s32 %s76, 1
      %s78 = scalar_select %p75, %s76, %s77
      %p81 = pneg %p75
      %p82 = scmp.eq.s32.totalorder %s28, 7
      %p83 = por %p81, %p82
      %p84 = scmp.ne.s32.totalorder %s76, %s79
      %p85 = scmp.eq.s32.totalorder %s28, 0
      %p86 = por %p84, %p85
      %p87 = scmp.ne.s32.totalorder %s76, %s79
      %p88 = scmp.eq.s32.totalorder %s33, 7
      %p89 = por %p87, %p88
      %p90 = scmp.ne.s32.totalorder %s79, %s80
      %p91 = scmp.eq.s32.totalorder %s33, 0
      %p92 = por %p90, %p91
      %p93 = scmp.ne.s32.totalorder %s79, %s80
      %p94 = scmp.eq.s32.totalorder %s34, 7
      %p95 = por %p93, %p94
      %p97 = scmp.ne.s32.totalorder %s80, %s96
      %p98 = scmp.eq.s32.totalorder %s34, 0
      %p99 = por %p97, %p98
      %s100 = ssub.s32 %s35, %s47
      %p101 = scmp.eq.s32.totalorder %s100, 0
      %s103 = sadd.s32 %s102, 1
      %s104 = scalar_select %p101, %s102, %s103
      %p107 = pneg %p101
      %p108 = scmp.eq.s32.totalorder %s28, 7
      %p109 = por %p107, %p108
      %p110 = scmp.ne.s32.totalorder %s102, %s105
      %p111 = scmp.eq.s32.totalorder %s28, 0
      %p112 = por %p110, %p111
      %p113 = scmp.ne.s32.totalorder %s102, %s105
      %p114 = scmp.eq.s32.totalorder %s33, 7
      %p115 = por %p113, %p114
      %p116 = scmp.ne.s32.totalorder %s105, %s106
      %p117 = scmp.eq.s32.totalorder %s33, 0
      %p118 = por %p116, %p117
      %p119 = scmp.ne.s32.totalorder %s105, %s106
      %p120 = scmp.eq.s32.totalorder %s34, 7
      %p121 = por %p119, %p120
      %p123 = scmp.ne.s32.totalorder %s106, %s122
      %p124 = scmp.eq.s32.totalorder %s34, 0
      %p125 = por %p123, %p124
      %s126 = ssub.s32 %s35, %s47
      %s127 = ssub.s32 %s36, %s43
      %s128 = sor.u32 %s126, %s127
      %p129 = scmp.eq.s32.totalorder %s128, 0
      %s131 = sadd.s32 %s130, 1
      %s132 = scalar_select %p129, %s130, %s131
      %p135 = pneg %p129
      %p136 = scmp.eq.s32.totalorder %s28, 7
      %p137 = por %p135, %p136
      %p138 = scmp.ne.s32.totalorder %s130, %s133
      %p139 = scmp.eq.s32.totalorder %s28, 0
      %p140 = por %p138, %p139
      %p141 = scmp.ne.s32.totalorder %s130, %s133
      %p142 = scmp.eq.s32.totalorder %s33, 7
      %p143 = por %p141, %p142
      %p144 = scmp.ne.s32.totalorder %s133, %s134
      %p145 = scmp.eq.s32.totalorder %s33, 0
      %p146 = por %p144, %p145
      %p147 = scmp.ne.s32.totalorder %s133, %s134
      %p148 = scmp.eq.s32.totalorder %s34, 7
      %p149 = por %p147, %p148
      %p151 = scmp.ne.s32.totalorder %s134, %s150
      %p152 = scmp.eq.s32.totalorder %s34, 0
      %p153 = por %p151, %p152
      %s154 = ssub.s32 %s36, %s43
      %p155 = scmp.eq.s32.totalorder %s154, 0
      %s157 = sadd.s32 %s156, 1
      %s158 = scalar_select %p155, %s156, %s157
      %p161 = pneg %p155
      %p162 = scmp.eq.s32.totalorder %s28, 7
      %p163 = por %p161, %p162
      %p164 = scmp.ne.s32.totalorder %s156, %s159
      %p165 = scmp.eq.s32.totalorder %s28, 0
      %p166 = por %p164, %p165
      %p167 = scmp.ne.s32.totalorder %s156, %s159
      %p168 = scmp.eq.s32.totalorder %s33, 7
      %p169 = por %p167, %p168
      %p170 = scmp.ne.s32.totalorder %s159, %s160
      %p171 = scmp.eq.s32.totalorder %s33, 0
      %p172 = por %p170, %p171
      %p173 = scmp.ne.s32.totalorder %s159, %s160
      %p174 = scmp.eq.s32.totalorder %s34, 7
      %p175 = por %p173, %p174
      %p177 = scmp.ne.s32.totalorder %s160, %s176
      %p178 = scmp.eq.s32.totalorder %s34, 0
      %p179 = por %p177, %p178
      %s180 = ssub.s32 %s35, %s47
      %p181 = scmp.eq.s32.totalorder %s180, 0
      %s183 = sadd.s32 %s182, 1
      %s184 = scalar_select %p181, %s182, %s183
      %p187 = pneg %p181
      %p188 = scmp.eq.s32.totalorder %s28, 7
      %p189 = por %p187, %p188
      %p190 = scmp.ne.s32.totalorder %s182, %s185
      %p191 = scmp.eq.s32.totalorder %s28, 0
      %p192 = por %p190, %p191
      %p193 = scmp.ne.s32.totalorder %s182, %s185
      %p194 = scmp.eq.s32.totalorder %s33, 7
      %p195 = por %p193, %p194
      %p196 = scmp.ne.s32.totalorder %s185, %s186
      %p197 = scmp.eq.s32.totalorder %s33, 0
      %p198 = por %p196, %p197
      %p199 = scmp.ne.s32.totalorder %s185, %s186
      %p200 = scmp.eq.s32.totalorder %s34, 7
      %p201 = por %p199, %p200
      %p203 = scmp.ne.s32.totalorder %s186, %s202
      %p204 = scmp.eq.s32.totalorder %s34, 0
      %p205 = por %p203, %p204
      %s207 = sadd.s32 %s206, 1
      %p210 = scmp.eq.s32.totalorder %s28, 7
      %p211 = scmp.ne.s32.totalorder %s206, %s208
      %p212 = scmp.eq.s32.totalorder %s28, 0
      %p213 = por %p211, %p212
      %p214 = scmp.ne.s32.totalorder %s206, %s208
      %p215 = scmp.eq.s32.totalorder %s33, 7
      %p216 = por %p214, %p215
      %p217 = scmp.ne.s32.totalorder %s208, %s209
      %p218 = scmp.eq.s32.totalorder %s33, 0
      %p219 = por %p217, %p218
      %p220 = scmp.ne.s32.totalorder %s208, %s209
      %p221 = scmp.eq.s32.totalorder %s34, 7
      %p222 = por %p220, %p221
      %p224 = scmp.ne.s32.totalorder %s209, %s223
      %p225 = scmp.eq.s32.totalorder %s34, 0
      %p226 = por %p224, %p225
      %s227 = ssub.s32 %s35, %s47
      %p228 = scmp.eq.s32.totalorder %s227, 0
      %s230 = sadd.s32 %s229, 1
      %s231 = scalar_select %p228, %s229, %s230
      %p234 = pneg %p228
      %p235 = scmp.eq.s32.totalorder %s28, 7
      %p236 = por %p234, %p235
      %p237 = scmp.ne.s32.totalorder %s229, %s232
      %p238 = scmp.eq.s32.totalorder %s28, 0
      %p239 = por %p237, %p238
      %p240 = scmp.ne.s32.totalorder %s229, %s232
      %p241 = scmp.eq.s32.totalorder %s33, 7
      %p242 = por %p240, %p241
      %p243 = scmp.ne.s32.totalorder %s232, %s233
      %p244 = scmp.eq.s32.totalorder %s33, 0
      %p245 = por %p243, %p244
      %p246 = scmp.ne.s32.totalorder %s232, %s233
      %p247 = scmp.eq.s32.totalorder %s34, 7
      %p248 = por %p246, %p247
      %p250 = scmp.ne.s32.totalorder %s233, %s249
      %p251 = scmp.eq.s32.totalorder %s34, 0
      %p252 = por %p250, %p251
      %p253 = scmp.le.s32.totalorder 1, %s28
      %p254 = scmp.lt.s32.totalorder %s28, 9
      %p255 = pnand %p253, %p254
      %p256 = pneg %p255
      // Predicated region
      $region9: #{gcn_forward.1} parent=5 // pred_check
        _
      $region10: #{gcn_forward.1} parent=5 // pred_check_branch
        %258 = sbr.rel (%p255) target = $region12
      $region11: #{gcn_forward.1} parent=5 // pred_region
        %s259 = ssub.s32 %s28, 1
        // Predicated region
        $region13: #{gcn_forward.1} parent=11 // pred_check
          %p260 = pneg %p219
        $region14: #{gcn_forward.1} parent=11 // pred_check_branch
          %262 = sbr.rel (%p260) target = $region16
        $region15: #{gcn_forward.1} parent=11 // pred_region
          %s264 = ssub.s32 2048, 2048
          %265 = vsyncadd [#allocation14], %s264
          %s266 = sshll.u32 [#allocation15], 4
          %s267 = int_to_ptr.vmem [resolvable:$true] %s266
          %272 = dma.hbm_to_vmem [thread:$0]  %s6, 2048, %s267, [#allocation14], 128, 128, 8
        $region16: #{gcn_forward.1} parent=11 // pred_fallthru
          _
      $region12: #{gcn_forward.1} parent=5 // pred_fallthru
        _
      %p273 = scmp.lt.s32.totalorder %s28, 8
      // Predicated region
      $region17: #{gcn_forward.1} parent=5 // pred_check
        %p274 = pneg %p273
      $region18: #{gcn_forward.1} parent=5 // pred_check_branch
        %276 = sbr.rel (%p274) target = $region20
      $region19: #{gcn_forward.1} parent=5 // pred_region
        // Predicated region
        $region21: #{gcn_forward.1} parent=19 // pred_check
          %p277 = pneg %p60
        $region22: #{gcn_forward.1} parent=19 // pred_check_branch
          %279 = sbr.rel (%p277) target = $region24
        $region23: #{gcn_forward.1} parent=19 // pred_region
          %s280 = sand.u32 %s50, 1
          %s281 = scalar_lea.sflag [#allocation5], %s280
          %s282 = sand.u32 %s50, 1
          %s283 = smul.addr %s282, 128
          %s284 = scalar_lea.vmem [#allocation4], %s283
          %s285 = smul.u32 16, %s35
          %s287 = ssub.s32 2048, 2048
          %288 = vsyncadd %s281, %s287
          %s289 = smul.addr %s285, 128
          %s290 = scalar_lea.hbm %s0, %s289
          %s291 = sshll.u32 %s284, 4
          %s292 = int_to_ptr.vmem [resolvable:$true] %s291
          %297 = dma.hbm_to_vmem [thread:$0]  %s290, 2048, %s292, %s281, 128, 128, 8
        $region24: #{gcn_forward.1} parent=19 // pred_fallthru
          _
        // Predicated region
        $region25: #{gcn_forward.1} parent=19 // pred_check
          %p298 = pneg %p86
        $region26: #{gcn_forward.1} parent=19 // pred_check_branch
          %300 = sbr.rel (%p298) target = $region28
        $region27: #{gcn_forward.1} parent=19 // pred_region
          %s301 = sand.u32 %s28, 1
          %s302 = scalar_lea.sflag [#allocation8], %s301
          %s303 = sand.u32 %s76, 1
          %s304 = smul.addr %s303, 2
          %s305 = scalar_lea.vmem [#allocation7], %s304
          %s306 = smul.u32 2, %s36
          %s308 = ssub.s32 32, 32
          %309 = vsyncadd %s302, %s308
          %s310 = smul.addr %s306, 16
          %s311 = scalar_lea.hbm %s1, %s310
          %s313 = sshll.u32 %s305, 4
          %s314 = int_to_ptr.vmem [resolvable:$true] %s313
          %316 = dma.hbm_to_vmem [thread:$0]  %s311, 32, %s314, %s302
        $region28: #{gcn_forward.1} parent=19 // pred_fallthru
          _
        // Predicated region
        $region29: #{gcn_forward.1} parent=19 // pred_check
          %p317 = pneg %p112
        $region30: #{gcn_forward.1} parent=19 // pred_check_branch
          %319 = sbr.rel (%p317) target = $region32
        $region31: #{gcn_forward.1} parent=19 // pred_region
          %s320 = sand.u32 %s28, 1
          %s321 = scalar_lea.sflag [#allocation8], %s320
          %s322 = sand.u32 %s102, 1
          %s323 = smul.addr %s322, 128
          %s324 = scalar_lea.vmem [#allocation9], %s323
          %s325 = smul.u32 16, %s35
          %s327 = ssub.s32 2048, 2048
          %328 = vsyncadd %s321, %s327
          %s329 = smul.addr %s325, 128
          %s330 = scalar_lea.hbm %s2, %s329
          %s331 = sshll.u32 %s324, 4
          %s332 = int_to_ptr.vmem [resolvable:$true] %s331
          %337 = dma.hbm_to_vmem [thread:$0]  %s330, 2048, %s332, %s321, 128, 128, 8
        $region32: #{gcn_forward.1} parent=19 // pred_fallthru
          _
        // Predicated region
        $region33: #{gcn_forward.1} parent=19 // pred_check
          %p338 = pneg %p140
        $region34: #{gcn_forward.1} parent=19 // pred_check_branch
          %340 = sbr.rel (%p338) target = $region36
        $region35: #{gcn_forward.1} parent=19 // pred_region
          %s341 = sand.u32 %s28, 1
          %s342 = scalar_lea.sflag [#allocation11], %s341
          %s343 = sand.u32 %s130, 1
          %s344 = smul.addr %s343, 64
          %s345 = scalar_lea.vmem [#allocation10], %s344
          %s346 = smul.u32 4, %s35
          %s347 = smul.u32 2, %s36
          %s349 = ssub.s32 1024, 1024
          %350 = vsyncadd %s342, %s349
          %s351 = smul.addr %s346, 4
          %s352 = sadd.s32 %s347, %s351
          %s353 = smul.addr %s352, 128
          %s354 = scalar_lea.hbm %s3, %s353
          %s355 = sshll.u32 %s345, 4
          %s356 = int_to_ptr.vmem [resolvable:$true] %s355
          %361 = dma.hbm_to_vmem [thread:$0]  %s354, 1024, %s356, %s342, 512, 256, 16
        $region36: #{gcn_forward.1} parent=19 // pred_fallthru
          _
        // Predicated region
        $region37: #{gcn_forward.1} parent=19 // pred_check
          %p362 = pneg %p166
        $region38: #{gcn_forward.1} parent=19 // pred_check_branch
          %364 = sbr.rel (%p362) target = $region40
        $region39: #{gcn_forward.1} parent=19 // pred_region
          %s365 = sand.u32 %s28, 1
          %s366 = scalar_lea.sflag [#allocation11], %s365
          %s367 = sand.u32 %s156, 1
          %s368 = smul.addr %s367, 128
          %s369 = scalar_lea.vmem [#allocation12], %s368
          %s370 = smul.u32 32, %s36
          %s372 = ssub.s32 2048, 2048
          %373 = vsyncadd %s366, %s372
          %s374 = smul.addr %s370, 64
          %s375 = scalar_lea.hbm %s4, %s374
          %s376 = sshll.u32 %s369, 4
          %s377 = int_to_ptr.vmem [resolvable:$true] %s376
          %382 = dma.hbm_to_vmem [thread:$0]  %s375, 2048, %s377, %s366, 64, 64, 4
        $region40: #{gcn_forward.1} parent=19 // pred_fallthru
          _
        // Predicated region
        $region41: #{gcn_forward.1} parent=19 // pred_check
          %p383 = pneg %p192
        $region42: #{gcn_forward.1} parent=19 // pred_check_branch
          %385 = sbr.rel (%p383) target = $region44
        $region43: #{gcn_forward.1} parent=19 // pred_region
          %s386 = sand.u32 %s28, 1
          %s387 = scalar_lea.sflag [#allocation14], %s386
          %s388 = sand.u32 %s182, 1
          %s389 = smul.addr %s388, 128
          %s390 = scalar_lea.vmem [#allocation13], %s389
          %s391 = smul.u32 16, %s35
          %s393 = ssub.s32 2048, 2048
          %394 = vsyncadd %s387, %s393
          %s395 = smul.addr %s391, 128
          %s396 = scalar_lea.hbm %s5, %s395
          %s397 = sshll.u32 %s390, 4
          %s398 = int_to_ptr.vmem [resolvable:$true] %s397
          %403 = dma.hbm_to_vmem [thread:$0]  %s396, 2048, %s398, %s387, 128, 128, 8
        $region44: #{gcn_forward.1} parent=19 // pred_fallthru
          _
      $region20: #{gcn_forward.1} parent=5 // pred_fallthru
        _
      %p404 = scmp.le.s32.totalorder 1, %s28
      %p405 = scmp.lt.s32.totalorder %s28, 9
      %p406 = pnand %p404, %p405
      %p407 = pneg %p406
      // Predicated region
      $region45: #{gcn_forward.1} parent=5 // pred_check
        _
      $region46: #{gcn_forward.1} parent=5 // pred_check_branch
        %409 = sbr.rel (%p406) target = $region48
      $region47: #{gcn_forward.1} parent=5 // pred_region
        %s410 = ssub.s32 %s28, 1
        %s411 = sand.u32 %s53, 1
        %s412 = scalar_lea.sflag [#allocation5], %s411
        %s413 = sand.u32 %s53, 1
        %s414 = smul.addr %s413, 128
        %s415 = scalar_lea.vmem [#allocation4], %s414
        // Predicated region
        $region49: #{gcn_forward.1} parent=47 // pred_check
          %p416 = pneg %p66
        $region50: #{gcn_forward.1} parent=47 // pred_check_branch
          %418 = sbr.rel (%p416) target = $region52
        $region51: #{gcn_forward.1} parent=47 // pred_region
          %419 = dma.done %s412, 2048
        $region52: #{gcn_forward.1} parent=47 // pred_fallthru
          _
        %s420 = sand.u32 %s33, 1
        %s421 = scalar_lea.sflag [#allocation8], %s420
        %s422 = sand.u32 %s79, 1
        %s423 = smul.addr %s422, 2
        %s424 = scalar_lea.vmem [#allocation7], %s423
        // Predicated region
        $region53: #{gcn_forward.1} parent=47 // pred_check
          %p425 = pneg %p92
        $region54: #{gcn_forward.1} parent=47 // pred_check_branch
          %427 = sbr.rel (%p425) target = $region56
        $region55: #{gcn_forward.1} parent=47 // pred_region
          %428 = dma.done %s421, 32
        $region56: #{gcn_forward.1} parent=47 // pred_fallthru
          _
        %s429 = sand.u32 %s33, 1
        %s430 = scalar_lea.sflag [#allocation8], %s429
        %s431 = sand.u32 %s105, 1
        %s432 = smul.addr %s431, 128
        %s433 = scalar_lea.vmem [#allocation9], %s432
        // Predicated region
        $region57: #{gcn_forward.1} parent=47 // pred_check
          %p434 = pneg %p118
        $region58: #{gcn_forward.1} parent=47 // pred_check_branch
          %436 = sbr.rel (%p434) target = $region60
        $region59: #{gcn_forward.1} parent=47 // pred_region
          %437 = dma.done %s430, 2048
        $region60: #{gcn_forward.1} parent=47 // pred_fallthru
          _
        %s438 = sand.u32 %s33, 1
        %s439 = scalar_lea.sflag [#allocation11], %s438
        %s440 = sand.u32 %s133, 1
        %s441 = smul.addr %s440, 64
        %s442 = scalar_lea.vmem [#allocation10], %s441
        // Predicated region
        $region61: #{gcn_forward.1} parent=47 // pred_check
          %p443 = pneg %p146
        $region62: #{gcn_forward.1} parent=47 // pred_check_branch
          %445 = sbr.rel (%p443) target = $region64
        $region63: #{gcn_forward.1} parent=47 // pred_region
          %446 = dma.done %s439, 1024
        $region64: #{gcn_forward.1} parent=47 // pred_fallthru
          _
        %s447 = sand.u32 %s33, 1
        %s448 = scalar_lea.sflag [#allocation11], %s447
        %s449 = sand.u32 %s159, 1
        %s450 = smul.addr %s449, 128
        %s451 = scalar_lea.vmem [#allocation12], %s450
        // Predicated region
        $region65: #{gcn_forward.1} parent=47 // pred_check
          %p452 = pneg %p172
        $region66: #{gcn_forward.1} parent=47 // pred_check_branch
          %454 = sbr.rel (%p452) target = $region68
        $region67: #{gcn_forward.1} parent=47 // pred_region
          %455 = dma.done %s448, 2048
        $region68: #{gcn_forward.1} parent=47 // pred_fallthru
          _
        %s456 = sand.u32 %s33, 1
        %s457 = scalar_lea.sflag [#allocation14], %s456
        %s458 = sand.u32 %s185, 1
        %s459 = smul.addr %s458, 128
        %s460 = scalar_lea.vmem [#allocation13], %s459
        // Predicated region
        $region69: #{gcn_forward.1} parent=47 // pred_check
          %p461 = pneg %p198
        $region70: #{gcn_forward.1} parent=47 // pred_check_branch
          %463 = sbr.rel (%p461) target = $region72
        $region71: #{gcn_forward.1} parent=47 // pred_region
          %464 = dma.done %s457, 2048
        $region72: #{gcn_forward.1} parent=47 // pred_fallthru
          _
        // Predicated region
        $region73: #{gcn_forward.1} parent=47 // pred_check
          %p465 = pneg %p219
        $region74: #{gcn_forward.1} parent=47 // pred_check_branch
          %467 = sbr.rel (%p465) target = $region76
        $region75: #{gcn_forward.1} parent=47 // pred_region
          %468 = dma.done [#allocation14], 2048
        $region76: #{gcn_forward.1} parent=47 // pred_fallthru
          _
        %s469 = sand.u32 %s53, 1
        %s470 = scalar_lea.sflag [#allocation5], %s469
        %s471 = sand.u32 %s53, 1
        %s472 = smul.addr %s471, 128
        %s473 = scalar_lea.vmem [#allocation4], %s472
        %p474 = pneg %p66
        %p475 = pneg %p63
        %s476 = sand.u32 %s33, 1
        %s477 = scalar_lea.sflag [#allocation8], %s476
        %s478 = sand.u32 %s79, 1
        %s479 = smul.addr %s478, 2
        %s480 = scalar_lea.vmem [#allocation7], %s479
        %p481 = pneg %p92
        %p482 = pneg %p89
        %s483 = sand.u32 %s33, 1
        %s484 = scalar_lea.sflag [#allocation8], %s483
        %s485 = sand.u32 %s105, 1
        %s486 = smul.addr %s485, 128
        %s487 = scalar_lea.vmem [#allocation9], %s486
        %p488 = pneg %p118
        %p489 = pneg %p115
        %s490 = sand.u32 %s33, 1
        %s491 = scalar_lea.sflag [#allocation11], %s490
        %s492 = sand.u32 %s133, 1
        %s493 = smul.addr %s492, 64
        %s494 = scalar_lea.vmem [#allocation10], %s493
        %p495 = pneg %p146
        %p496 = pneg %p143
        %s497 = sand.u32 %s33, 1
        %s498 = scalar_lea.sflag [#allocation11], %s497
        %s499 = sand.u32 %s159, 1
        %s500 = smul.addr %s499, 128
        %s501 = scalar_lea.vmem [#allocation12], %s500
        %p502 = pneg %p172
        %p503 = pneg %p169
        %s504 = sand.u32 %s33, 1
        %s505 = scalar_lea.sflag [#allocation14], %s504
        %s506 = sand.u32 %s185, 1
        %s507 = smul.addr %s506, 128
        %s508 = scalar_lea.vmem [#allocation13], %s507
        %p509 = pneg %p198
        %p510 = pneg %p195
        %p511 = pneg %p219
        %p512 = pneg %p216
        %p513 = pneg %p245
        %p514 = pneg %p242
        %s515 = sand.u32 %s232, 1
        %s516 = scalar_lea.sflag [#allocation6], %s515
        %s517 = sand.u32 %s232, 1
        %s518 = smul.addr %s517, 128
        %s519 = scalar_lea.vmem [#allocation16], %s518
        %s520 = smul.u32 16, %s37
        %s521 = smul.u32 2, %s38
        %s522 = smul.u32 16, %s37
        %s523 = smul.u32 4, %s37
        %s524 = smul.u32 2, %s38
        %s525 = smul.u32 32, %s38
        %s526 = smul.u32 16, %s37
        %s527 = smul.u32 16, %s37
        %p529 = scmp.eq.s32.totalorder %s38, 0
        // Predicated region
        $region77: #{gcn_forward.1} parent=47 // pred_check
          %p530 = pneg %p529
        $region78: #{gcn_forward.1} parent=47 // pred_check_branch
          %532 = sbr.rel (%p530) target = $region80
        $region79: #{gcn_forward.1} parent=47 // pred_region
          %vm533 = vcmask 7168
          %534 = vst.msk [vmem:[#allocation2] sm:$0xff] %vm533, 0.0
          %535 = vst.msk [vmem:[#allocation2 + $0x8] sm:$0xff] %vm533, 0.0
          %536 = vst.msk [vmem:[#allocation2 + $0x10] sm:$0xff] %vm533, 0.0
          %537 = vst.msk [vmem:[#allocation2 + $0x18] sm:$0xff] %vm533, 0.0
          %538 = vst.msk [vmem:[#allocation2 + $0x20] sm:$0xff] %vm533, 0.0
          %539 = vst.msk [vmem:[#allocation2 + $0x28] sm:$0xff] %vm533, 0.0
          %540 = vst.msk [vmem:[#allocation2 + $0x30] sm:$0xff] %vm533, 0.0
          %541 = vst.msk [vmem:[#allocation2 + $0x38] sm:$0xff] %vm533, 0.0
          %542 = vst.msk [vmem:[#allocation2 + $0x40] sm:$0xff] %vm533, 0.0
          %543 = vst.msk [vmem:[#allocation2 + $0x48] sm:$0xff] %vm533, 0.0
          %544 = vst.msk [vmem:[#allocation2 + $0x50] sm:$0xff] %vm533, 0.0
          %545 = vst.msk [vmem:[#allocation2 + $0x58] sm:$0xff] %vm533, 0.0
          %546 = vst.msk [vmem:[#allocation2 + $0x60] sm:$0xff] %vm533, 0.0
          %547 = vst.msk [vmem:[#allocation2 + $0x68] sm:$0xff] %vm533, 0.0
          %548 = vst.msk [vmem:[#allocation2 + $0x70] sm:$0xff] %vm533, 0.0
          %549 = vst.msk [vmem:[#allocation2 + $0x78] sm:$0xff] %vm533, 0.0
          %550 = vst [vmem:[#allocation3] sm:$0xff] 0.0
          %551 = vst [vmem:[#allocation3 + $0x8] sm:$0xff] 0.0
          %552 = vst [vmem:[#allocation3 + $0x10] sm:$0xff] 0.0
          %553 = vst [vmem:[#allocation3 + $0x18] sm:$0xff] 0.0
          %554 = vst [vmem:[#allocation3 + $0x20] sm:$0xff] 0.0
          %555 = vst [vmem:[#allocation3 + $0x28] sm:$0xff] 0.0
          %556 = vst [vmem:[#allocation3 + $0x30] sm:$0xff] 0.0
          %557 = vst [vmem:[#allocation3 + $0x38] sm:$0xff] 0.0
          %558 = vst [vmem:[#allocation3 + $0x40] sm:$0xff] 0.0
          %559 = vst [vmem:[#allocation3 + $0x48] sm:$0xff] 0.0
          %560 = vst [vmem:[#allocation3 + $0x50] sm:$0xff] 0.0
          %561 = vst [vmem:[#allocation3 + $0x58] sm:$0xff] 0.0
          %562 = vst [vmem:[#allocation3 + $0x60] sm:$0xff] 0.0
          %563 = vst [vmem:[#allocation3 + $0x68] sm:$0xff] 0.0
          %564 = vst [vmem:[#allocation3 + $0x70] sm:$0xff] 0.0
          %565 = vst [vmem:[#allocation3 + $0x78] sm:$0xff] 0.0
        $region80: #{gcn_forward.1} parent=47 // pred_fallthru
          _
        %v566 = vld [vmem:[%s415] sm:$0xff]
        %v567 = vld [vmem:[%s415 + $0x8] sm:$0xff]
        %v568 = vld [vmem:[%s415 + $0x10] sm:$0xff]
        %v569 = vld [vmem:[%s415 + $0x18] sm:$0xff]
        %v570 = vld [vmem:[%s415 + $0x20] sm:$0xff]
        %v571 = vld [vmem:[%s415 + $0x28] sm:$0xff]
        %v572 = vld [vmem:[%s415 + $0x30] sm:$0xff]
        %v573 = vld [vmem:[%s415 + $0x38] sm:$0xff]
        %v574 = vld [vmem:[%s415 + $0x40] sm:$0xff]
        %v575 = vld [vmem:[%s415 + $0x48] sm:$0xff]
        %v576 = vld [vmem:[%s415 + $0x50] sm:$0xff]
        %v577 = vld [vmem:[%s415 + $0x58] sm:$0xff]
        %v578 = vld [vmem:[%s415 + $0x60] sm:$0xff]
        %v579 = vld [vmem:[%s415 + $0x68] sm:$0xff]
        %v580 = vld [vmem:[%s415 + $0x70] sm:$0xff]
        %v581 = vld [vmem:[%s415 + $0x78] sm:$0xff]
        %v582 = vld [vmem:[%s424] sm:$0x3]
        %584 = vset.pattern.permute.xlu0 0
        %585 = vperm.xlu0 %584, %v566
        %v586 = vpop.permute.xlu0 %585
        %589 = vset.pattern.permute.xlu0 0
        %590 = vperm.xlu0 %589, %v567
        %v591 = vpop.permute.xlu0 %590
        %594 = vset.pattern.permute.xlu0 0
        %595 = vperm.xlu0 %594, %v568
        %v596 = vpop.permute.xlu0 %595
        %599 = vset.pattern.permute.xlu0 0
        %600 = vperm.xlu0 %599, %v569
        %v601 = vpop.permute.xlu0 %600
        %604 = vset.pattern.permute.xlu0 0
        %605 = vperm.xlu0 %604, %v570
        %v606 = vpop.permute.xlu0 %605
        %609 = vset.pattern.permute.xlu0 0
        %610 = vperm.xlu0 %609, %v571
        %v611 = vpop.permute.xlu0 %610
        %614 = vset.pattern.permute.xlu0 0
        %615 = vperm.xlu0 %614, %v572
        %v616 = vpop.permute.xlu0 %615
        %619 = vset.pattern.permute.xlu0 0
        %620 = vperm.xlu0 %619, %v573
        %v621 = vpop.permute.xlu0 %620
        %624 = vset.pattern.permute.xlu0 0
        %625 = vperm.xlu0 %624, %v574
        %v626 = vpop.permute.xlu0 %625
        %629 = vset.pattern.permute.xlu0 0
        %630 = vperm.xlu0 %629, %v575
        %v631 = vpop.permute.xlu0 %630
        %634 = vset.pattern.permute.xlu0 0
        %635 = vperm.xlu0 %634, %v576
        %v636 = vpop.permute.xlu0 %635
        %639 = vset.pattern.permute.xlu0 0
        %640 = vperm.xlu0 %639, %v577
        %v641 = vpop.permute.xlu0 %640
        %644 = vset.pattern.permute.xlu0 0
        %645 = vperm.xlu0 %644, %v578
        %v646 = vpop.permute.xlu0 %645
        %649 = vset.pattern.permute.xlu0 0
        %650 = vperm.xlu0 %649, %v579
        %v651 = vpop.permute.xlu0 %650
        %654 = vset.pattern.permute.xlu0 0
        %655 = vperm.xlu0 %654, %v580
        %v656 = vpop.permute.xlu0 %655
        %659 = vset.pattern.permute.xlu0 0
        %660 = vperm.xlu0 %659, %v581
        %v661 = vpop.permute.xlu0 %660
        %v664 = vlaneseq
        %v665 = vshrl.u32 %v664, 7
        %v666 = vsub.s32 0, %v665
        %v667 = vrot.slane %v582, %v666
        %v668 = vlaneseq
        %v669 = vshrl.u32 %v668, 7
        %v670 = vsub.s32 1, %v669
        %v671 = vrot.slane %v582, %v670
        %v674 = vadd.f32 %v586, %v667
        %v675 = vadd.f32 %v586, %v671
        %v676 = vadd.f32 %v591, %v667
        %v677 = vadd.f32 %v591, %v671
        %v678 = vadd.f32 %v596, %v667
        %v679 = vadd.f32 %v596, %v671
        %v680 = vadd.f32 %v601, %v667
        %v681 = vadd.f32 %v601, %v671
        %v682 = vadd.f32 %v606, %v667
        %v683 = vadd.f32 %v606, %v671
        %v684 = vadd.f32 %v611, %v667
        %v685 = vadd.f32 %v611, %v671
        %v686 = vadd.f32 %v616, %v667
        %v687 = vadd.f32 %v616, %v671
        %v688 = vadd.f32 %v621, %v667
        %v689 = vadd.f32 %v621, %v671
        %v690 = vadd.f32 %v626, %v667
        %v691 = vadd.f32 %v626, %v671
        %v692 = vadd.f32 %v631, %v667
        %v693 = vadd.f32 %v631, %v671
        %v694 = vadd.f32 %v636, %v667
        %v695 = vadd.f32 %v636, %v671
        %v696 = vadd.f32 %v641, %v667
        %v697 = vadd.f32 %v641, %v671
        %v698 = vadd.f32 %v646, %v667
        %v699 = vadd.f32 %v646, %v671
        %v700 = vadd.f32 %v651, %v667
        %v701 = vadd.f32 %v651, %v671
        %v702 = vadd.f32 %v656, %v667
        %v703 = vadd.f32 %v656, %v671
        %v704 = vadd.f32 %v661, %v667
        %v705 = vadd.f32 %v661, %v671
        %vm706 = vcmp.gt.f32.partialorder %v674, 0.0
        %vm707 = vcmp.gt.f32.partialorder %v675, 0.0
        %vm708 = vcmp.gt.f32.partialorder %v676, 0.0
        %vm709 = vcmp.gt.f32.partialorder %v677, 0.0
        %vm710 = vcmp.gt.f32.partialorder %v678, 0.0
        %vm711 = vcmp.gt.f32.partialorder %v679, 0.0
        %vm712 = vcmp.gt.f32.partialorder %v680, 0.0
        %vm713 = vcmp.gt.f32.partialorder %v681, 0.0
        %vm714 = vcmp.gt.f32.partialorder %v682, 0.0
        %vm715 = vcmp.gt.f32.partialorder %v683, 0.0
        %vm716 = vcmp.gt.f32.partialorder %v684, 0.0
        %vm717 = vcmp.gt.f32.partialorder %v685, 0.0
        %vm718 = vcmp.gt.f32.partialorder %v686, 0.0
        %vm719 = vcmp.gt.f32.partialorder %v687, 0.0
        %vm720 = vcmp.gt.f32.partialorder %v688, 0.0
        %vm721 = vcmp.gt.f32.partialorder %v689, 0.0
        %vm722 = vcmp.gt.f32.partialorder %v690, 0.0
        %vm723 = vcmp.gt.f32.partialorder %v691, 0.0
        %vm724 = vcmp.gt.f32.partialorder %v692, 0.0
        %vm725 = vcmp.gt.f32.partialorder %v693, 0.0
        %vm726 = vcmp.gt.f32.partialorder %v694, 0.0
        %vm727 = vcmp.gt.f32.partialorder %v695, 0.0
        %vm728 = vcmp.gt.f32.partialorder %v696, 0.0
        %vm729 = vcmp.gt.f32.partialorder %v697, 0.0
        %vm730 = vcmp.gt.f32.partialorder %v698, 0.0
        %vm731 = vcmp.gt.f32.partialorder %v699, 0.0
        %vm732 = vcmp.gt.f32.partialorder %v700, 0.0
        %vm733 = vcmp.gt.f32.partialorder %v701, 0.0
        %vm734 = vcmp.gt.f32.partialorder %v702, 0.0
        %vm735 = vcmp.gt.f32.partialorder %v703, 0.0
        %vm736 = vcmp.gt.f32.partialorder %v704, 0.0
        %vm737 = vcmp.gt.f32.partialorder %v705, 0.0
        %v738 = vmul.f32 %v674, 0.01
        %v739 = vmul.f32 %v675, 0.01
        %v740 = vmul.f32 %v676, 0.01
        %v741 = vmul.f32 %v677, 0.01
        %v742 = vmul.f32 %v678, 0.01
        %v743 = vmul.f32 %v679, 0.01
        %v744 = vmul.f32 %v680, 0.01
        %v745 = vmul.f32 %v681, 0.01
        %v746 = vmul.f32 %v682, 0.01
        %v747 = vmul.f32 %v683, 0.01
        %v748 = vmul.f32 %v684, 0.01
        %v749 = vmul.f32 %v685, 0.01
        %v750 = vmul.f32 %v686, 0.01
        %v751 = vmul.f32 %v687, 0.01
        %v752 = vmul.f32 %v688, 0.01
        %v753 = vmul.f32 %v689, 0.01
        %v754 = vmul.f32 %v690, 0.01
        %v755 = vmul.f32 %v691, 0.01
        %v756 = vmul.f32 %v692, 0.01
        %v757 = vmul.f32 %v693, 0.01
        %v758 = vmul.f32 %v694, 0.01
        %v759 = vmul.f32 %v695, 0.01
        %v760 = vmul.f32 %v696, 0.01
        %v761 = vmul.f32 %v697, 0.01
        %v762 = vmul.f32 %v698, 0.01
        %v763 = vmul.f32 %v699, 0.01
        %v764 = vmul.f32 %v700, 0.01
        %v765 = vmul.f32 %v701, 0.01
        %v766 = vmul.f32 %v702, 0.01
        %v767 = vmul.f32 %v703, 0.01
        %v768 = vmul.f32 %v704, 0.01
        %v769 = vmul.f32 %v705, 0.01
        %v770 = vsel %vm706, %v674, %v738
        %v771 = vsel %vm707, %v675, %v739
        %v772 = vsel %vm708, %v676, %v740
        %v773 = vsel %vm709, %v677, %v741
        %v774 = vsel %vm710, %v678, %v742
        %v775 = vsel %vm711, %v679, %v743
        %v776 = vsel %vm712, %v680, %v744
        %v777 = vsel %vm713, %v681, %v745
        %v778 = vsel %vm714, %v682, %v746
        %v779 = vsel %vm715, %v683, %v747
        %v780 = vsel %vm716, %v684, %v748
        %v781 = vsel %vm717, %v685, %v749
        %v782 = vsel %vm718, %v686, %v750
        %v783 = vsel %vm719, %v687, %v751
        %v784 = vsel %vm720, %v688, %v752
        %v785 = vsel %vm721, %v689, %v753
        %v786 = vsel %vm722, %v690, %v754
        %v787 = vsel %vm723, %v691, %v755
        %v788 = vsel %vm724, %v692, %v756
        %v789 = vsel %vm725, %v693, %v757
        %v790 = vsel %vm726, %v694, %v758
        %v791 = vsel %vm727, %v695, %v759
        %v792 = vsel %vm728, %v696, %v760
        %v793 = vsel %vm729, %v697, %v761
        %v794 = vsel %vm730, %v698, %v762
        %v795 = vsel %vm731, %v699, %v763
        %v796 = vsel %vm732, %v700, %v764
        %v797 = vsel %vm733, %v701, %v765
        %v798 = vsel %vm734, %v702, %v766
        %v799 = vsel %vm735, %v703, %v767
        %v800 = vsel %vm736, %v704, %v768
        %v801 = vsel %vm737, %v705, %v769
        %v802 = vld [vmem:[%s433] sm:$0xff]
        %v803 = vld [vmem:[%s433 + $0x8] sm:$0xff]
        %v804 = vld [vmem:[%s433 + $0x10] sm:$0xff]
        %v805 = vld [vmem:[%s433 + $0x18] sm:$0xff]
        %v806 = vld [vmem:[%s433 + $0x20] sm:$0xff]
        %v807 = vld [vmem:[%s433 + $0x28] sm:$0xff]
        %v808 = vld [vmem:[%s433 + $0x30] sm:$0xff]
        %v809 = vld [vmem:[%s433 + $0x38] sm:$0xff]
        %v810 = vld [vmem:[%s433 + $0x40] sm:$0xff]
        %v811 = vld [vmem:[%s433 + $0x48] sm:$0xff]
        %v812 = vld [vmem:[%s433 + $0x50] sm:$0xff]
        %v813 = vld [vmem:[%s433 + $0x58] sm:$0xff]
        %v814 = vld [vmem:[%s433 + $0x60] sm:$0xff]
        %v815 = vld [vmem:[%s433 + $0x68] sm:$0xff]
        %v816 = vld [vmem:[%s433 + $0x70] sm:$0xff]
        %v817 = vld [vmem:[%s433 + $0x78] sm:$0xff]
        %819 = vset.pattern.permute.xlu0 0
        %820 = vperm.xlu0 %819, %v802
        %v821 = vpop.permute.xlu0 %820
        %824 = vset.pattern.permute.xlu0 0
        %825 = vperm.xlu0 %824, %v803
        %v826 = vpop.permute.xlu0 %825
        %829 = vset.pattern.permute.xlu0 0
        %830 = vperm.xlu0 %829, %v804
        %v831 = vpop.permute.xlu0 %830
        %834 = vset.pattern.permute.xlu0 0
        %835 = vperm.xlu0 %834, %v805
        %v836 = vpop.permute.xlu0 %835
        %839 = vset.pattern.permute.xlu0 0
        %840 = vperm.xlu0 %839, %v806
        %v841 = vpop.permute.xlu0 %840
        %844 = vset.pattern.permute.xlu0 0
        %845 = vperm.xlu0 %844, %v807
        %v846 = vpop.permute.xlu0 %845
        %849 = vset.pattern.permute.xlu0 0
        %850 = vperm.xlu0 %849, %v808
        %v851 = vpop.permute.xlu0 %850
        %854 = vset.pattern.permute.xlu0 0
        %855 = vperm.xlu0 %854, %v809
        %v856 = vpop.permute.xlu0 %855
        %859 = vset.pattern.permute.xlu0 0
        %860 = vperm.xlu0 %859, %v810
        %v861 = vpop.permute.xlu0 %860
        %864 = vset.pattern.permute.xlu0 0
        %865 = vperm.xlu0 %864, %v811
        %v866 = vpop.permute.xlu0 %865
        %869 = vset.pattern.permute.xlu0 0
        %870 = vperm.xlu0 %869, %v812
        %v871 = vpop.permute.xlu0 %870
        %874 = vset.pattern.permute.xlu0 0
        %875 = vperm.xlu0 %874, %v813
        %v876 = vpop.permute.xlu0 %875
        %879 = vset.pattern.permute.xlu0 0
        %880 = vperm.xlu0 %879, %v814
        %v881 = vpop.permute.xlu0 %880
        %884 = vset.pattern.permute.xlu0 0
        %885 = vperm.xlu0 %884, %v815
        %v886 = vpop.permute.xlu0 %885
        %889 = vset.pattern.permute.xlu0 0
        %890 = vperm.xlu0 %889, %v816
        %v891 = vpop.permute.xlu0 %890
        %894 = vset.pattern.permute.xlu0 0
        %895 = vperm.xlu0 %894, %v817
        %v896 = vpop.permute.xlu0 %895
        %v898 = vsub.f32 %v770, %v821
        %v899 = vsub.f32 %v771, %v821
        %v900 = vsub.f32 %v772, %v826
        %v901 = vsub.f32 %v773, %v826
        %v902 = vsub.f32 %v774, %v831
        %v903 = vsub.f32 %v775, %v831
        %v904 = vsub.f32 %v776, %v836
        %v905 = vsub.f32 %v777, %v836
        %v906 = vsub.f32 %v778, %v841
        %v907 = vsub.f32 %v779, %v841
        %v908 = vsub.f32 %v780, %v846
        %v909 = vsub.f32 %v781, %v846
        %v910 = vsub.f32 %v782, %v851
        %v911 = vsub.f32 %v783, %v851
        %v912 = vsub.f32 %v784, %v856
        %v913 = vsub.f32 %v785, %v856
        %v914 = vsub.f32 %v786, %v861
        %v915 = vsub.f32 %v787, %v861
        %v916 = vsub.f32 %v788, %v866
        %v917 = vsub.f32 %v789, %v866
        %v918 = vsub.f32 %v790, %v871
        %v919 = vsub.f32 %v791, %v871
        %v920 = vsub.f32 %v792, %v876
        %v921 = vsub.f32 %v793, %v876
        %v922 = vsub.f32 %v794, %v881
        %v923 = vsub.f32 %v795, %v881
        %v924 = vsub.f32 %v796, %v886
        %v925 = vsub.f32 %v797, %v886
        %v926 = vsub.f32 %v798, %v891
        %v927 = vsub.f32 %v799, %v891
        %v928 = vsub.f32 %v800, %v896
        %v929 = vsub.f32 %v801, %v896
        %v930 = vld [vmem:[%s442] sm:$0xff]
        %v931 = vld [vmem:[%s442 + $0x8] sm:$0xff]
        %v932 = vld [vmem:[%s442 + $0x10] sm:$0xff]
        %v933 = vld [vmem:[%s442 + $0x18] sm:$0xff]
        %v934 = vld [vmem:[%s442 + $0x20] sm:$0xff]
        %v935 = vld [vmem:[%s442 + $0x28] sm:$0xff]
        %v936 = vld [vmem:[%s442 + $0x30] sm:$0xff]
        %v937 = vld [vmem:[%s442 + $0x38] sm:$0xff]
        %v938 = vunpack.c.0.s8 %v930
        %v939 = vunpack.c.0.s8 %v931
        %v940 = vunpack.c.1.s8 %v930
        %v941 = vunpack.c.1.s8 %v931
        %v942 = vunpack.c.2.s8 %v930
        %v943 = vunpack.c.2.s8 %v931
        %v944 = vunpack.c.3.s8 %v930
        %v945 = vunpack.c.3.s8 %v931
        %v946 = vunpack.c.0.s8 %v932
        %v947 = vunpack.c.0.s8 %v933
        %v948 = vunpack.c.1.s8 %v932
        %v949 = vunpack.c.1.s8 %v933
        %v950 = vunpack.c.2.s8 %v932
        %v951 = vunpack.c.2.s8 %v933
        %v952 = vunpack.c.3.s8 %v932
        %v953 = vunpack.c.3.s8 %v933
        %v954 = vunpack.c.0.s8 %v934
        %v955 = vunpack.c.0.s8 %v935
        %v956 = vunpack.c.1.s8 %v934
        %v957 = vunpack.c.1.s8 %v935
        %v958 = vunpack.c.2.s8 %v934
        %v959 = vunpack.c.2.s8 %v935
        %v960 = vunpack.c.3.s8 %v934
        %v961 = vunpack.c.3.s8 %v935
        %v962 = vunpack.c.0.s8 %v936
        %v963 = vunpack.c.0.s8 %v937
        %v964 = vunpack.c.1.s8 %v936
        %v965 = vunpack.c.1.s8 %v937
        %v966 = vunpack.c.2.s8 %v936
        %v967 = vunpack.c.2.s8 %v937
        %v968 = vunpack.c.3.s8 %v936
        %v969 = vunpack.c.3.s8 %v937
        %v970 = vcvt.s32.f32 %v938
        %v971 = vcvt.s32.f32 %v939
        %v972 = vcvt.s32.f32 %v940
        %v973 = vcvt.s32.f32 %v941
        %v974 = vcvt.s32.f32 %v942
        %v975 = vcvt.s32.f32 %v943
        %v976 = vcvt.s32.f32 %v944
        %v977 = vcvt.s32.f32 %v945
        %v978 = vcvt.s32.f32 %v946
        %v979 = vcvt.s32.f32 %v947
        %v980 = vcvt.s32.f32 %v948
        %v981 = vcvt.s32.f32 %v949
        %v982 = vcvt.s32.f32 %v950
        %v983 = vcvt.s32.f32 %v951
        %v984 = vcvt.s32.f32 %v952
        %v985 = vcvt.s32.f32 %v953
        %v986 = vcvt.s32.f32 %v954
        %v987 = vcvt.s32.f32 %v955
        %v988 = vcvt.s32.f32 %v956
        %v989 = vcvt.s32.f32 %v957
        %v990 = vcvt.s32.f32 %v958
        %v991 = vcvt.s32.f32 %v959
        %v992 = vcvt.s32.f32 %v960
        %v993 = vcvt.s32.f32 %v961
        %v994 = vcvt.s32.f32 %v962
        %v995 = vcvt.s32.f32 %v963
        %v996 = vcvt.s32.f32 %v964
        %v997 = vcvt.s32.f32 %v965
        %v998 = vcvt.s32.f32 %v966
        %v999 = vcvt.s32.f32 %v967
        %v1000 = vcvt.s32.f32 %v968
        %v1001 = vcvt.s32.f32 %v969
        %v1002 = vmul.f32 %v898, 1.442695
        %v1003 = vpow.pop %v1002
        %v1004 = vmul.f32 %v899, 1.442695
        %v1005 = vpow.pop %v1004
        %v1006 = vmul.f32 %v900, 1.442695
        %v1007 = vpow.pop %v1006
        %v1008 = vmul.f32 %v901, 1.442695
        %v1009 = vpow.pop %v1008
        %v1010 = vmul.f32 %v902, 1.442695
        %v1011 = vpow.pop %v1010
        %v1012 = vmul.f32 %v903, 1.442695
        %v1013 = vpow.pop %v1012
        %v1014 = vmul.f32 %v904, 1.442695
        %v1015 = vpow.pop %v1014
        %v1016 = vmul.f32 %v905, 1.442695
        %v1017 = vpow.pop %v1016
        %v1018 = vmul.f32 %v906, 1.442695
        %v1019 = vpow.pop %v1018
        %v1020 = vmul.f32 %v907, 1.442695
        %v1021 = vpow.pop %v1020
        %v1022 = vmul.f32 %v908, 1.442695
        %v1023 = vpow.pop %v1022
        %v1024 = vmul.f32 %v909, 1.442695
        %v1025 = vpow.pop %v1024
        %v1026 = vmul.f32 %v910, 1.442695
        %v1027 = vpow.pop %v1026
        %v1028 = vmul.f32 %v911, 1.442695
        %v1029 = vpow.pop %v1028
        %v1030 = vmul.f32 %v912, 1.442695
        %v1031 = vpow.pop %v1030
        %v1032 = vmul.f32 %v913, 1.442695
        %v1033 = vpow.pop %v1032
        %v1034 = vmul.f32 %v914, 1.442695
        %v1035 = vpow.pop %v1034
        %v1036 = vmul.f32 %v915, 1.442695
        %v1037 = vpow.pop %v1036
        %v1038 = vmul.f32 %v916, 1.442695
        %v1039 = vpow.pop %v1038
        %v1040 = vmul.f32 %v917, 1.442695
        %v1041 = vpow.pop %v1040
        %v1042 = vmul.f32 %v918, 1.442695
        %v1043 = vpow.pop %v1042
        %v1044 = vmul.f32 %v919, 1.442695
        %v1045 = vpow.pop %v1044
        %v1046 = vmul.f32 %v920, 1.442695
        %v1047 = vpow.pop %v1046
        %v1048 = vmul.f32 %v921, 1.442695
        %v1049 = vpow.pop %v1048
        %v1050 = vmul.f32 %v922, 1.442695
        %v1051 = vpow.pop %v1050
        %v1052 = vmul.f32 %v923, 1.442695
        %v1053 = vpow.pop %v1052
        %v1054 = vmul.f32 %v924, 1.442695
        %v1055 = vpow.pop %v1054
        %v1056 = vmul.f32 %v925, 1.442695
        %v1057 = vpow.pop %v1056
        %v1058 = vmul.f32 %v926, 1.442695
        %v1059 = vpow.pop %v1058
        %v1060 = vmul.f32 %v927, 1.442695
        %v1061 = vpow.pop %v1060
        %v1062 = vmul.f32 %v928, 1.442695
        %v1063 = vpow.pop %v1062
        %v1064 = vmul.f32 %v929, 1.442695
        %v1065 = vpow.pop %v1064
        %v1066 = vmul.f32 %v1003, %v970
        %v1067 = vmul.f32 %v1005, %v971
        %v1068 = vmul.f32 %v1007, %v972
        %v1069 = vmul.f32 %v1009, %v973
        %v1070 = vmul.f32 %v1011, %v974
        %v1071 = vmul.f32 %v1013, %v975
        %v1072 = vmul.f32 %v1015, %v976
        %v1073 = vmul.f32 %v1017, %v977
        %v1074 = vmul.f32 %v1019, %v978
        %v1075 = vmul.f32 %v1021, %v979
        %v1076 = vmul.f32 %v1023, %v980
        %v1077 = vmul.f32 %v1025, %v981
        %v1078 = vmul.f32 %v1027, %v982
        %v1079 = vmul.f32 %v1029, %v983
        %v1080 = vmul.f32 %v1031, %v984
        %v1081 = vmul.f32 %v1033, %v985
        %v1082 = vmul.f32 %v1035, %v986
        %v1083 = vmul.f32 %v1037, %v987
        %v1084 = vmul.f32 %v1039, %v988
        %v1085 = vmul.f32 %v1041, %v989
        %v1086 = vmul.f32 %v1043, %v990
        %v1087 = vmul.f32 %v1045, %v991
        %v1088 = vmul.f32 %v1047, %v992
        %v1089 = vmul.f32 %v1049, %v993
        %v1090 = vmul.f32 %v1051, %v994
        %v1091 = vmul.f32 %v1053, %v995
        %v1092 = vmul.f32 %v1055, %v996
        %v1093 = vmul.f32 %v1057, %v997
        %v1094 = vmul.f32 %v1059, %v998
        %v1095 = vmul.f32 %v1061, %v999
        %v1096 = vmul.f32 %v1063, %v1000
        %v1097 = vmul.f32 %v1065, %v1001
        %v1098 = vld [vmem:[#allocation2] sm:$0xff]
        %v1099 = vld [vmem:[#allocation2 + $0x8] sm:$0xff]
        %v1100 = vld [vmem:[#allocation2 + $0x10] sm:$0xff]
        %v1101 = vld [vmem:[#allocation2 + $0x18] sm:$0xff]
        %v1102 = vld [vmem:[#allocation2 + $0x20] sm:$0xff]
        %v1103 = vld [vmem:[#allocation2 + $0x28] sm:$0xff]
        %v1104 = vld [vmem:[#allocation2 + $0x30] sm:$0xff]
        %v1105 = vld [vmem:[#allocation2 + $0x38] sm:$0xff]
        %v1106 = vld [vmem:[#allocation2 + $0x40] sm:$0xff]
        %v1107 = vld [vmem:[#allocation2 + $0x48] sm:$0xff]
        %v1108 = vld [vmem:[#allocation2 + $0x50] sm:$0xff]
        %v1109 = vld [vmem:[#allocation2 + $0x58] sm:$0xff]
        %v1110 = vld [vmem:[#allocation2 + $0x60] sm:$0xff]
        %v1111 = vld [vmem:[#allocation2 + $0x68] sm:$0xff]
        %v1112 = vld [vmem:[#allocation2 + $0x70] sm:$0xff]
        %v1113 = vld [vmem:[#allocation2 + $0x78] sm:$0xff]
        %v1114 = vadd.f32 %v1066, %v1067
        %1115 = vadd.xlane.f32.xlu0 %v1114
        %v1116 = vpop.xlane.xlu0 %1115
        %v1117 = vadd.f32 %v1068, %v1069
        %1118 = vadd.xlane.f32.xlu0 %v1117
        %v1119 = vpop.xlane.xlu0 %1118
        %v1120 = vadd.f32 %v1070, %v1071
        %1121 = vadd.xlane.f32.xlu0 %v1120
        %v1122 = vpop.xlane.xlu0 %1121
        %v1123 = vadd.f32 %v1072, %v1073
        %1124 = vadd.xlane.f32.xlu0 %v1123
        %v1125 = vpop.xlane.xlu0 %1124
        %v1126 = vadd.f32 %v1074, %v1075
        %1127 = vadd.xlane.f32.xlu0 %v1126
        %v1128 = vpop.xlane.xlu0 %1127
        %v1129 = vadd.f32 %v1076, %v1077
        %1130 = vadd.xlane.f32.xlu0 %v1129
        %v1131 = vpop.xlane.xlu0 %1130
        %v1132 = vadd.f32 %v1078, %v1079
        %1133 = vadd.xlane.f32.xlu0 %v1132
        %v1134 = vpop.xlane.xlu0 %1133
        %v1135 = vadd.f32 %v1080, %v1081
        %1136 = vadd.xlane.f32.xlu0 %v1135
        %v1137 = vpop.xlane.xlu0 %1136
        %v1138 = vadd.f32 %v1082, %v1083
        %1139 = vadd.xlane.f32.xlu0 %v1138
        %v1140 = vpop.xlane.xlu0 %1139
        %v1141 = vadd.f32 %v1084, %v1085
        %1142 = vadd.xlane.f32.xlu0 %v1141
        %v1143 = vpop.xlane.xlu0 %1142
        %v1144 = vadd.f32 %v1086, %v1087
        %1145 = vadd.xlane.f32.xlu0 %v1144
        %v1146 = vpop.xlane.xlu0 %1145
        %v1147 = vadd.f32 %v1088, %v1089
        %1148 = vadd.xlane.f32.xlu0 %v1147
        %v1149 = vpop.xlane.xlu0 %1148
        %v1150 = vadd.f32 %v1090, %v1091
        %1151 = vadd.xlane.f32.xlu0 %v1150
        %v1152 = vpop.xlane.xlu0 %1151
        %v1153 = vadd.f32 %v1092, %v1093
        %1154 = vadd.xlane.f32.xlu0 %v1153
        %v1155 = vpop.xlane.xlu0 %1154
        %v1156 = vadd.f32 %v1094, %v1095
        %1157 = vadd.xlane.f32.xlu0 %v1156
        %v1158 = vpop.xlane.xlu0 %1157
        %v1159 = vadd.f32 %v1096, %v1097
        %1160 = vadd.xlane.f32.xlu0 %v1159
        %v1161 = vpop.xlane.xlu0 %1160
        %v1162 = vadd.f32 %v1098, %v1116
        %v1163 = vadd.f32 %v1099, %v1119
        %v1164 = vadd.f32 %v1100, %v1122
        %v1165 = vadd.f32 %v1101, %v1125
        %v1166 = vadd.f32 %v1102, %v1128
        %v1167 = vadd.f32 %v1103, %v1131
        %v1168 = vadd.f32 %v1104, %v1134
        %v1169 = vadd.f32 %v1105, %v1137
        %v1170 = vadd.f32 %v1106, %v1140
        %v1171 = vadd.f32 %v1107, %v1143
        %v1172 = vadd.f32 %v1108, %v1146
        %v1173 = vadd.f32 %v1109, %v1149
        %v1174 = vadd.f32 %v1110, %v1152
        %v1175 = vadd.f32 %v1111, %v1155
        %v1176 = vadd.f32 %v1112, %v1158
        %v1177 = vadd.f32 %v1113, %v1161
        %vm1178 = vcmask 7168
        %1179 = vst.msk [vmem:[#allocation2] sm:$0xff] %vm1178, %v1162
        %1180 = vst.msk [vmem:[#allocation2 + $0x8] sm:$0xff] %vm1178, %v1163
        %1181 = vst.msk [vmem:[#allocation2 + $0x10] sm:$0xff] %vm1178, %v1164
        %1182 = vst.msk [vmem:[#allocation2 + $0x18] sm:$0xff] %vm1178, %v1165
        %1183 = vst.msk [vmem:[#allocation2 + $0x20] sm:$0xff] %vm1178, %v1166
        %1184 = vst.msk [vmem:[#allocation2 + $0x28] sm:$0xff] %vm1178, %v1167
        %1185 = vst.msk [vmem:[#allocation2 + $0x30] sm:$0xff] %vm1178, %v1168
        %1186 = vst.msk [vmem:[#allocation2 + $0x38] sm:$0xff] %vm1178, %v1169
        %1187 = vst.msk [vmem:[#allocation2 + $0x40] sm:$0xff] %vm1178, %v1170
        %1188 = vst.msk [vmem:[#allocation2 + $0x48] sm:$0xff] %vm1178, %v1171
        %1189 = vst.msk [vmem:[#allocation2 + $0x50] sm:$0xff] %vm1178, %v1172
        %1190 = vst.msk [vmem:[#allocation2 + $0x58] sm:$0xff] %vm1178, %v1173
        %1191 = vst.msk [vmem:[#allocation2 + $0x60] sm:$0xff] %vm1178, %v1174
        %1192 = vst.msk [vmem:[#allocation2 + $0x68] sm:$0xff] %vm1178, %v1175
        %1193 = vst.msk [vmem:[#allocation2 + $0x70] sm:$0xff] %vm1178, %v1176
        %1194 = vst.msk [vmem:[#allocation2 + $0x78] sm:$0xff] %vm1178, %v1177
        %v1195 = vld [vmem:[#allocation3] sm:$0xff]
        %v1196 = vld [vmem:[#allocation3 + $0x8] sm:$0xff]
        %v1197 = vld [vmem:[#allocation3 + $0x10] sm:$0xff]
        %v1198 = vld [vmem:[#allocation3 + $0x18] sm:$0xff]
        %v1199 = vld [vmem:[#allocation3 + $0x20] sm:$0xff]
        %v1200 = vld [vmem:[#allocation3 + $0x28] sm:$0xff]
        %v1201 = vld [vmem:[#allocation3 + $0x30] sm:$0xff]
        %v1202 = vld [vmem:[#allocation3 + $0x38] sm:$0xff]
        %v1203 = vld [vmem:[#allocation3 + $0x40] sm:$0xff]
        %v1204 = vld [vmem:[#allocation3 + $0x48] sm:$0xff]
        %v1205 = vld [vmem:[#allocation3 + $0x50] sm:$0xff]
        %v1206 = vld [vmem:[#allocation3 + $0x58] sm:$0xff]
        %v1207 = vld [vmem:[#allocation3 + $0x60] sm:$0xff]
        %v1208 = vld [vmem:[#allocation3 + $0x68] sm:$0xff]
        %v1209 = vld [vmem:[#allocation3 + $0x70] sm:$0xff]
        %v1210 = vld [vmem:[#allocation3 + $0x78] sm:$0xff]
        %v1211 = vpack.c.bf16 %v1068, %v1066
        %v1212 = vpack.c.bf16 %v1069, %v1067
        %v1213 = vpack.c.bf16 %v1072, %v1070
        %v1214 = vpack.c.bf16 %v1073, %v1071
        %v1215 = vpack.c.bf16 %v1076, %v1074
        %v1216 = vpack.c.bf16 %v1077, %v1075
        %v1217 = vpack.c.bf16 %v1080, %v1078
        %v1218 = vpack.c.bf16 %v1081, %v1079
        %v1219 = vpack.c.bf16 %v1084, %v1082
        %v1220 = vpack.c.bf16 %v1085, %v1083
        %v1221 = vpack.c.bf16 %v1088, %v1086
        %v1222 = vpack.c.bf16 %v1089, %v1087
        %v1223 = vpack.c.bf16 %v1092, %v1090
        %v1224 = vpack.c.bf16 %v1093, %v1091
        %v1225 = vpack.c.bf16 %v1096, %v1094
        %v1226 = vpack.c.bf16 %v1097, %v1095
        %v1227 = vld [vmem:[%s451] sm:$0xf]
        %v1228 = vld [vmem:[%s451 + $0x4] sm:$0xf]
        %v1229 = vld [vmem:[%s451 + $0x8] sm:$0xf]
        %v1230 = vld [vmem:[%s451 + $0xc] sm:$0xf]
        %v1231 = vld [vmem:[%s451 + $0x10] sm:$0xf]
        %v1232 = vld [vmem:[%s451 + $0x14] sm:$0xf]
        %v1233 = vld [vmem:[%s451 + $0x18] sm:$0xf]
        %v1234 = vld [vmem:[%s451 + $0x1c] sm:$0xf]
        %v1235 = vld [vmem:[%s451 + $0x20] sm:$0xf]
        %v1236 = vld [vmem:[%s451 + $0x24] sm:$0xf]
        %v1237 = vld [vmem:[%s451 + $0x28] sm:$0xf]
        %v1238 = vld [vmem:[%s451 + $0x2c] sm:$0xf]
        %v1239 = vld [vmem:[%s451 + $0x30] sm:$0xf]
        %v1240 = vld [vmem:[%s451 + $0x34] sm:$0xf]
        %v1241 = vld [vmem:[%s451 + $0x38] sm:$0xf]
        %v1242 = vld [vmem:[%s451 + $0x3c] sm:$0xf]
        %v1243 = vld [vmem:[%s451 + $0x40] sm:$0xf]
        %v1244 = vld [vmem:[%s451 + $0x44] sm:$0xf]
        %v1245 = vld [vmem:[%s451 + $0x48] sm:$0xf]
        %v1246 = vld [vmem:[%s451 + $0x4c] sm:$0xf]
        %v1247 = vld [vmem:[%s451 + $0x50] sm:$0xf]
        %v1248 = vld [vmem:[%s451 + $0x54] sm:$0xf]
        %v1249 = vld [vmem:[%s451 + $0x58] sm:$0xf]
        %v1250 = vld [vmem:[%s451 + $0x5c] sm:$0xf]
        %v1251 = vld [vmem:[%s451 + $0x60] sm:$0xf]
        %v1252 = vld [vmem:[%s451 + $0x64] sm:$0xf]
        %v1253 = vld [vmem:[%s451 + $0x68] sm:$0xf]
        %v1254 = vld [vmem:[%s451 + $0x6c] sm:$0xf]
        %v1255 = vld [vmem:[%s451 + $0x70] sm:$0xf]
        %v1256 = vld [vmem:[%s451 + $0x74] sm:$0xf]
        %v1257 = vld [vmem:[%s451 + $0x78] sm:$0xf]
        %v1258 = vld [vmem:[%s451 + $0x7c] sm:$0xf]
        %v1291 = vunpack.c.l.b16 %v1227
        %v1292 = vunpack.c.l.b16 %v1228
        %v1293 = vunpack.c.l.b16 %v1229
        %v1294 = vunpack.c.l.b16 %v1230
        %v1295 = vunpack.c.l.b16 %v1231
        %v1296 = vunpack.c.l.b16 %v1232
        %v1297 = vunpack.c.l.b16 %v1233
        %v1298 = vunpack.c.l.b16 %v1234
        %v1299 = vunpack.c.l.b16 %v1235
        %v1300 = vunpack.c.l.b16 %v1236
        %v1301 = vunpack.c.l.b16 %v1237
        %v1302 = vunpack.c.l.b16 %v1238
        %v1303 = vunpack.c.l.b16 %v1239
        %v1304 = vunpack.c.l.b16 %v1240
        %v1305 = vunpack.c.l.b16 %v1241
        %v1306 = vunpack.c.l.b16 %v1242
        %v1307 = vunpack.c.l.b16 %v1243
        %v1308 = vunpack.c.l.b16 %v1244
        %v1309 = vunpack.c.l.b16 %v1245
        %v1310 = vunpack.c.l.b16 %v1246
        %v1311 = vunpack.c.l.b16 %v1247
        %v1312 = vunpack.c.l.b16 %v1248
        %v1313 = vunpack.c.l.b16 %v1249
        %v1314 = vunpack.c.l.b16 %v1250
        %v1315 = vunpack.c.l.b16 %v1251
        %v1316 = vunpack.c.l.b16 %v1252
        %v1317 = vunpack.c.l.b16 %v1253
        %v1318 = vunpack.c.l.b16 %v1254
        %v1319 = vunpack.c.l.b16 %v1255
        %v1320 = vunpack.c.l.b16 %v1256
        %v1321 = vunpack.c.l.b16 %v1257
        %v1322 = vunpack.c.l.b16 %v1258
        %v1323 = vpack.c.b16 %v1292, %v1291
        %v1324 = vpack.c.b16 %v1294, %v1293
        %v1325 = vpack.c.b16 %v1296, %v1295
        %v1326 = vpack.c.b16 %v1298, %v1297
        %v1327 = vpack.c.b16 %v1300, %v1299
        %v1328 = vpack.c.b16 %v1302, %v1301
        %v1329 = vpack.c.b16 %v1304, %v1303
        %v1330 = vpack.c.b16 %v1306, %v1305
        %v1331 = vpack.c.b16 %v1308, %v1307
        %v1332 = vpack.c.b16 %v1310, %v1309
        %v1333 = vpack.c.b16 %v1312, %v1311
        %v1334 = vpack.c.b16 %v1314, %v1313
        %v1335 = vpack.c.b16 %v1316, %v1315
        %v1336 = vpack.c.b16 %v1318, %v1317
        %v1337 = vpack.c.b16 %v1320, %v1319
        %v1338 = vpack.c.b16 %v1322, %v1321
        %1355 = vmatprep.subr.bf16.mxu0 0
        %1356 = vmatpush1.bf16.msra.mxu0 %v1323
        %1357 = vmatprep.subr.bf16.mxu0 0
        %1358 = vmatpush1.bf16.msra.mxu0 %v1324
        %1359 = vmatprep.subr.bf16.mxu0 0
        %1360 = vmatpush1.bf16.msra.mxu0 %v1325
        %1361 = vmatprep.subr.bf16.mxu0 0
        %1362 = vmatpush1.bf16.msra.mxu0 %v1326
        %1363 = vmatprep.subr.bf16.mxu0 0
        %1364 = vmatpush1.bf16.msra.mxu0 %v1327
        %1365 = vmatprep.subr.bf16.mxu0 0
        %1366 = vmatpush1.bf16.msra.mxu0 %v1328
        %1367 = vmatprep.subr.bf16.mxu0 0
        %1368 = vmatpush1.bf16.msra.mxu0 %v1329
        %1369 = vmatprep.subr.bf16.mxu0 0
        %1370 = vmatpush1.bf16.msra.mxu0 %v1330
        %1371 = vmatprep.subr.bf16.mxu0 0
        %1372 = vmatpush1.bf16.msra.mxu0 %v1331
        %1373 = vmatprep.subr.bf16.mxu0 0
        %1374 = vmatpush1.bf16.msra.mxu0 %v1332
        %1375 = vmatprep.subr.bf16.mxu0 0
        %1376 = vmatpush1.bf16.msra.mxu0 %v1333
        %1377 = vmatprep.subr.bf16.mxu0 0
        %1378 = vmatpush1.bf16.msra.mxu0 %v1334
        %1379 = vmatprep.subr.bf16.mxu0 0
        %1380 = vmatpush1.bf16.msra.mxu0 %v1335
        %1381 = vmatprep.subr.bf16.mxu0 0
        %1382 = vmatpush1.bf16.msra.mxu0 %v1336
        %1383 = vmatprep.subr.bf16.mxu0 0
        %1384 = vmatpush1.bf16.msra.mxu0 %v1337
        %1385 = vmatprep.subr.bf16.mxu0 0
        %1386 = vmatpush1.bf16.msra.mxu0 %v1338
        %1387 = vmatprep.mubr.bf16.mxu0 %v1212
        %1388 = vmatmul.mubr.bf16.gmra.mrb[0].mxu0 %v1211
        %v1389 = vpop.f32.mrb[0].mxu0
        %v1390 = vadd.f32 0.0, %v1389
        %v1391 = vpop.f32.mrb[0].mxu0
        %v1392 = vpop.f32.mrb[0].mxu0
        %v1393 = vadd.f32 0.0, %v1392
        %v1394 = vpop.f32.mrb[0].mxu0
        %1395 = vmatprep.mubr.bf16.mxu0 %v1214
        %1396 = vmatmul.mubr.bf16.gmra.mrb[0].mxu0 %v1213
        %v1397 = vpop.f32.mrb[0].mxu0
        %v1398 = vadd.f32 0.0, %v1397
        %v1399 = vpop.f32.mrb[0].mxu0
        %v1400 = vpop.f32.mrb[0].mxu0
        %v1401 = vadd.f32 0.0, %v1400
        %v1402 = vpop.f32.mrb[0].mxu0
        %1403 = vmatprep.mubr.bf16.mxu0 %v1216
        %1404 = vmatmul.mubr.bf16.gmra.mrb[0].mxu0 %v1215
        %v1405 = vpop.f32.mrb[0].mxu0
        %v1406 = vadd.f32 0.0, %v1405
        %v1407 = vpop.f32.mrb[0].mxu0
        %v1408 = vpop.f32.mrb[0].mxu0
        %v1409 = vadd.f32 0.0, %v1408
        %v1410 = vpop.f32.mrb[0].mxu0
        %1411 = vmatprep.mubr.bf16.mxu0 %v1218
        %1412 = vmatmul.mubr.bf16.gmra.mrb[0].mxu0 %v1217
        %v1413 = vpop.f32.mrb[0].mxu0
        %v1414 = vadd.f32 0.0, %v1413
        %v1415 = vpop.f32.mrb[0].mxu0
        %v1416 = vpop.f32.mrb[0].mxu0
        %v1417 = vadd.f32 0.0, %v1416
        %v1418 = vpop.f32.mrb[0].mxu0
        %1419 = vmatprep.mubr.bf16.mxu0 %v1220
        %1420 = vmatmul.mubr.bf16.gmra.mrb[0].mxu0 %v1219
        %v1421 = vpop.f32.mrb[0].mxu0
        %v1422 = vadd.f32 0.0, %v1421
        %v1423 = vpop.f32.mrb[0].mxu0
        %v1424 = vpop.f32.mrb[0].mxu0
        %v1425 = vadd.f32 0.0, %v1424
        %v1426 = vpop.f32.mrb[0].mxu0
        %1427 = vmatprep.mubr.bf16.mxu0 %v1222
        %1428 = vmatmul.mubr.bf16.gmra.mrb[0].mxu0 %v1221
        %v1429 = vpop.f32.mrb[0].mxu0
        %v1430 = vadd.f32 0.0, %v1429
        %v1431 = vpop.f32.mrb[0].mxu0
        %v1432 = vpop.f32.mrb[0].mxu0
        %v1433 = vadd.f32 0.0, %v1432
        %v1434 = vpop.f32.mrb[0].mxu0
        %1435 = vmatprep.mubr.bf16.mxu0 %v1224
        %1436 = vmatmul.mubr.bf16.gmra.mrb[0].mxu0 %v1223
        %v1437 = vpop.f32.mrb[0].mxu0
        %v1438 = vadd.f32 0.0, %v1437
        %v1439 = vpop.f32.mrb[0].mxu0
        %v1440 = vpop.f32.mrb[0].mxu0
        %v1441 = vadd.f32 0.0, %v1440
        %v1442 = vpop.f32.mrb[0].mxu0
        %1443 = vmatprep.mubr.bf16.mxu0 %v1226
        %1444 = vmatmul.mubr.bf16.gmra.mrb[0].mxu0 %v1225
        %v1445 = vpop.f32.mrb[0].mxu0
        %v1446 = vadd.f32 0.0, %v1445
        %v1447 = vpop.f32.mrb[0].mxu0
        %v1448 = vpop.f32.mrb[0].mxu0
        %v1449 = vadd.f32 0.0, %v1448
        %v1450 = vpop.f32.mrb[0].mxu0
        %1451 = vdwg.mxu0
        %v1452 = vadd.f32 %v1195, %v1390
        %v1453 = vadd.f32 %v1196, %v1393
        %v1454 = vadd.f32 %v1197, %v1398
        %v1455 = vadd.f32 %v1198, %v1401
        %v1456 = vadd.f32 %v1199, %v1406
        %v1457 = vadd.f32 %v1200, %v1409
        %v1458 = vadd.f32 %v1201, %v1414
        %v1459 = vadd.f32 %v1202, %v1417
        %v1460 = vadd.f32 %v1203, %v1422
        %v1461 = vadd.f32 %v1204, %v1425
        %v1462 = vadd.f32 %v1205, %v1430
        %v1463 = vadd.f32 %v1206, %v1433
        %v1464 = vadd.f32 %v1207, %v1438
        %v1465 = vadd.f32 %v1208, %v1441
        %v1466 = vadd.f32 %v1209, %v1446
        %v1467 = vadd.f32 %v1210, %v1449
        %1468 = vst [vmem:[#allocation3] sm:$0xff] %v1452
        %1469 = vst [vmem:[#allocation3 + $0x8] sm:$0xff] %v1453
        %1470 = vst [vmem:[#allocation3 + $0x10] sm:$0xff] %v1454
        %1471 = vst [vmem:[#allocation3 + $0x18] sm:$0xff] %v1455
        %1472 = vst [vmem:[#allocation3 + $0x20] sm:$0xff] %v1456
        %1473 = vst [vmem:[#allocation3 + $0x28] sm:$0xff] %v1457
        %1474 = vst [vmem:[#allocation3 + $0x30] sm:$0xff] %v1458
        %1475 = vst [vmem:[#allocation3 + $0x38] sm:$0xff] %v1459
        %1476 = vst [vmem:[#allocation3 + $0x40] sm:$0xff] %v1460
        %1477 = vst [vmem:[#allocation3 + $0x48] sm:$0xff] %v1461
        %1478 = vst [vmem:[#allocation3 + $0x50] sm:$0xff] %v1462
        %1479 = vst [vmem:[#allocation3 + $0x58] sm:$0xff] %v1463
        %1480 = vst [vmem:[#allocation3 + $0x60] sm:$0xff] %v1464
        %1481 = vst [vmem:[#allocation3 + $0x68] sm:$0xff] %v1465
        %1482 = vst [vmem:[#allocation3 + $0x70] sm:$0xff] %v1466
        %1483 = vst [vmem:[#allocation3 + $0x78] sm:$0xff] %v1467
        %p1484 = scmp.eq.s32.totalorder %s38, 1
        // Predicated region
        $region81: #{gcn_forward.1} parent=47 // pred_check
          %p1485 = pneg %p1484
        $region82: #{gcn_forward.1} parent=47 // pred_check_branch
          %1487 = sbr.rel (%p1485) target = $region84
        $region83: #{gcn_forward.1} parent=47 // pred_region
          %v1488 = vld [vmem:[#allocation2] sm:$0xff]
          %v1489 = vld [vmem:[#allocation2 + $0x8] sm:$0xff]
          %v1490 = vld [vmem:[#allocation2 + $0x10] sm:$0xff]
          %v1491 = vld [vmem:[#allocation2 + $0x18] sm:$0xff]
          %v1492 = vld [vmem:[#allocation2 + $0x20] sm:$0xff]
          %v1493 = vld [vmem:[#allocation2 + $0x28] sm:$0xff]
          %v1494 = vld [vmem:[#allocation2 + $0x30] sm:$0xff]
          %v1495 = vld [vmem:[#allocation2 + $0x38] sm:$0xff]
          %v1496 = vld [vmem:[#allocation2 + $0x40] sm:$0xff]
          %v1497 = vld [vmem:[#allocation2 + $0x48] sm:$0xff]
          %v1498 = vld [vmem:[#allocation2 + $0x50] sm:$0xff]
          %v1499 = vld [vmem:[#allocation2 + $0x58] sm:$0xff]
          %v1500 = vld [vmem:[#allocation2 + $0x60] sm:$0xff]
          %v1501 = vld [vmem:[#allocation2 + $0x68] sm:$0xff]
          %v1502 = vld [vmem:[#allocation2 + $0x70] sm:$0xff]
          %v1503 = vld [vmem:[#allocation2 + $0x78] sm:$0xff]
          %v1504 = vmax.f32 %v1488, 1e-30
          %v1505 = vmax.f32 %v1489, 1e-30
          %v1506 = vmax.f32 %v1490, 1e-30
          %v1507 = vmax.f32 %v1491, 1e-30
          %v1508 = vmax.f32 %v1492, 1e-30
          %v1509 = vmax.f32 %v1493, 1e-30
          %v1510 = vmax.f32 %v1494, 1e-30
          %v1511 = vmax.f32 %v1495, 1e-30
          %v1512 = vmax.f32 %v1496, 1e-30
          %v1513 = vmax.f32 %v1497, 1e-30
          %v1514 = vmax.f32 %v1498, 1e-30
          %v1515 = vmax.f32 %v1499, 1e-30
          %v1516 = vmax.f32 %v1500, 1e-30
          %v1517 = vmax.f32 %v1501, 1e-30
          %v1518 = vmax.f32 %v1502, 1e-30
          %v1519 = vmax.f32 %v1503, 1e-30
          %v1520 = vrcp.pop %v1504
          %v1521 = vrcp.pop %v1505
          %v1522 = vrcp.pop %v1506
          %v1523 = vrcp.pop %v1507
          %v1524 = vrcp.pop %v1508
          %v1525 = vrcp.pop %v1509
          %v1526 = vrcp.pop %v1510
          %v1527 = vrcp.pop %v1511
          %v1528 = vrcp.pop %v1512
          %v1529 = vrcp.pop %v1513
          %v1530 = vrcp.pop %v1514
          %v1531 = vrcp.pop %v1515
          %v1532 = vrcp.pop %v1516
          %v1533 = vrcp.pop %v1517
          %v1534 = vrcp.pop %v1518
          %v1535 = vrcp.pop %v1519
          %v1536 = vld [vmem:[#allocation3] sm:$0xff]
          %v1537 = vld [vmem:[#allocation3 + $0x8] sm:$0xff]
          %v1538 = vld [vmem:[#allocation3 + $0x10] sm:$0xff]
          %v1539 = vld [vmem:[#allocation3 + $0x18] sm:$0xff]
          %v1540 = vld [vmem:[#allocation3 + $0x20] sm:$0xff]
          %v1541 = vld [vmem:[#allocation3 + $0x28] sm:$0xff]
          %v1542 = vld [vmem:[#allocation3 + $0x30] sm:$0xff]
          %v1543 = vld [vmem:[#allocation3 + $0x38] sm:$0xff]
          %v1544 = vld [vmem:[#allocation3 + $0x40] sm:$0xff]
          %v1545 = vld [vmem:[#allocation3 + $0x48] sm:$0xff]
          %v1546 = vld [vmem:[#allocation3 + $0x50] sm:$0xff]
          %v1547 = vld [vmem:[#allocation3 + $0x58] sm:$0xff]
          %v1548 = vld [vmem:[#allocation3 + $0x60] sm:$0xff]
          %v1549 = vld [vmem:[#allocation3 + $0x68] sm:$0xff]
          %v1550 = vld [vmem:[#allocation3 + $0x70] sm:$0xff]
          %v1551 = vld [vmem:[#allocation3 + $0x78] sm:$0xff]
          %1553 = vset.pattern.permute.xlu0 0
          %1554 = vperm.xlu0 %1553, %v1520
          %v1555 = vpop.permute.xlu0 %1554
          %1558 = vset.pattern.permute.xlu0 0
          %1559 = vperm.xlu0 %1558, %v1521
          %v1560 = vpop.permute.xlu0 %1559
          %1563 = vset.pattern.permute.xlu0 0
          %1564 = vperm.xlu0 %1563, %v1522
          %v1565 = vpop.permute.xlu0 %1564
          %1568 = vset.pattern.permute.xlu0 0
          %1569 = vperm.xlu0 %1568, %v1523
          %v1570 = vpop.permute.xlu0 %1569
          %1573 = vset.pattern.permute.xlu0 0
          %1574 = vperm.xlu0 %1573, %v1524
          %v1575 = vpop.permute.xlu0 %1574
          %1578 = vset.pattern.permute.xlu0 0
          %1579 = vperm.xlu0 %1578, %v1525
          %v1580 = vpop.permute.xlu0 %1579
          %1583 = vset.pattern.permute.xlu0 0
          %1584 = vperm.xlu0 %1583, %v1526
          %v1585 = vpop.permute.xlu0 %1584
          %1588 = vset.pattern.permute.xlu0 0
          %1589 = vperm.xlu0 %1588, %v1527
          %v1590 = vpop.permute.xlu0 %1589
          %1593 = vset.pattern.permute.xlu0 0
          %1594 = vperm.xlu0 %1593, %v1528
          %v1595 = vpop.permute.xlu0 %1594
          %1598 = vset.pattern.permute.xlu0 0
          %1599 = vperm.xlu0 %1598, %v1529
          %v1600 = vpop.permute.xlu0 %1599
          %1603 = vset.pattern.permute.xlu0 0
          %1604 = vperm.xlu0 %1603, %v1530
          %v1605 = vpop.permute.xlu0 %1604
          %1608 = vset.pattern.permute.xlu0 0
          %1609 = vperm.xlu0 %1608, %v1531
          %v1610 = vpop.permute.xlu0 %1609
          %1613 = vset.pattern.permute.xlu0 0
          %1614 = vperm.xlu0 %1613, %v1532
          %v1615 = vpop.permute.xlu0 %1614
          %1618 = vset.pattern.permute.xlu0 0
          %1619 = vperm.xlu0 %1618, %v1533
          %v1620 = vpop.permute.xlu0 %1619
          %1623 = vset.pattern.permute.xlu0 0
          %1624 = vperm.xlu0 %1623, %v1534
          %v1625 = vpop.permute.xlu0 %1624
          %1628 = vset.pattern.permute.xlu0 0
          %1629 = vperm.xlu0 %1628, %v1535
          %v1630 = vpop.permute.xlu0 %1629
          %v1632 = vmul.f32 %v1536, %v1555
          %v1633 = vmul.f32 %v1537, %v1560
          %v1634 = vmul.f32 %v1538, %v1565
          %v1635 = vmul.f32 %v1539, %v1570
          %v1636 = vmul.f32 %v1540, %v1575
          %v1637 = vmul.f32 %v1541, %v1580
          %v1638 = vmul.f32 %v1542, %v1585
          %v1639 = vmul.f32 %v1543, %v1590
          %v1640 = vmul.f32 %v1544, %v1595
          %v1641 = vmul.f32 %v1545, %v1600
          %v1642 = vmul.f32 %v1546, %v1605
          %v1643 = vmul.f32 %v1547, %v1610
          %v1644 = vmul.f32 %v1548, %v1615
          %v1645 = vmul.f32 %v1549, %v1620
          %v1646 = vmul.f32 %v1550, %v1625
          %v1647 = vmul.f32 %v1551, %v1630
          %v1648 = vld [vmem:[#allocation15] sm:$0xff]
          %v1649 = vld [vmem:[#allocation15 + $0x8] sm:$0xff]
          %v1650 = vld [vmem:[#allocation15 + $0x10] sm:$0xff]
          %v1651 = vld [vmem:[#allocation15 + $0x18] sm:$0xff]
          %v1652 = vld [vmem:[#allocation15 + $0x20] sm:$0xff]
          %v1653 = vld [vmem:[#allocation15 + $0x28] sm:$0xff]
          %v1654 = vld [vmem:[#allocation15 + $0x30] sm:$0xff]
          %v1655 = vld [vmem:[#allocation15 + $0x38] sm:$0xff]
          %v1656 = vld [vmem:[#allocation15 + $0x40] sm:$0xff]
          %v1657 = vld [vmem:[#allocation15 + $0x48] sm:$0xff]
          %v1658 = vld [vmem:[#allocation15 + $0x50] sm:$0xff]
          %v1659 = vld [vmem:[#allocation15 + $0x58] sm:$0xff]
          %v1660 = vld [vmem:[#allocation15 + $0x60] sm:$0xff]
          %v1661 = vld [vmem:[#allocation15 + $0x68] sm:$0xff]
          %v1662 = vld [vmem:[#allocation15 + $0x70] sm:$0xff]
          %v1663 = vld [vmem:[#allocation15 + $0x78] sm:$0xff]
          %v1664 = vld [vmem:[%s460] sm:$0xff]
          %v1665 = vld [vmem:[%s460 + $0x8] sm:$0xff]
          %v1666 = vld [vmem:[%s460 + $0x10] sm:$0xff]
          %v1667 = vld [vmem:[%s460 + $0x18] sm:$0xff]
          %v1668 = vld [vmem:[%s460 + $0x20] sm:$0xff]
          %v1669 = vld [vmem:[%s460 + $0x28] sm:$0xff]
          %v1670 = vld [vmem:[%s460 + $0x30] sm:$0xff]
          %v1671 = vld [vmem:[%s460 + $0x38] sm:$0xff]
          %v1672 = vld [vmem:[%s460 + $0x40] sm:$0xff]
          %v1673 = vld [vmem:[%s460 + $0x48] sm:$0xff]
          %v1674 = vld [vmem:[%s460 + $0x50] sm:$0xff]
          %v1675 = vld [vmem:[%s460 + $0x58] sm:$0xff]
          %v1676 = vld [vmem:[%s460 + $0x60] sm:$0xff]
          %v1677 = vld [vmem:[%s460 + $0x68] sm:$0xff]
          %v1678 = vld [vmem:[%s460 + $0x70] sm:$0xff]
          %v1679 = vld [vmem:[%s460 + $0x78] sm:$0xff]
          %1680 = vmatprep.subr.mxu0 0.0
          %1681 = vmatpush1.msra.mxu0 %v1648
          %1682 = vmatprep.subr.mxu0 0.0
          %1683 = vmatpush1.msra.mxu0 %v1649
          %1684 = vmatprep.subr.mxu0 0.0
          %1685 = vmatpush1.msra.mxu0 %v1650
          %1686 = vmatprep.subr.mxu0 0.0
          %1687 = vmatpush1.msra.mxu0 %v1651
          %1688 = vmatprep.subr.mxu0 0.0
          %1689 = vmatpush1.msra.mxu0 %v1652
          %1690 = vmatprep.subr.mxu0 0.0
          %1691 = vmatpush1.msra.mxu0 %v1653
          %1692 = vmatprep.subr.mxu0 0.0
          %1693 = vmatpush1.msra.mxu0 %v1654
          %1694 = vmatprep.subr.mxu0 0.0
          %1695 = vmatpush1.msra.mxu0 %v1655
          %1696 = vmatprep.subr.mxu0 0.0
          %1697 = vmatpush1.msra.mxu0 %v1656
          %1698 = vmatprep.subr.mxu0 0.0
          %1699 = vmatpush1.msra.mxu0 %v1657
          %1700 = vmatprep.subr.mxu0 0.0
          %1701 = vmatpush1.msra.mxu0 %v1658
          %1702 = vmatprep.subr.mxu0 0.0
          %1703 = vmatpush1.msra.mxu0 %v1659
          %1704 = vmatprep.subr.mxu0 0.0
          %1705 = vmatpush1.msra.mxu0 %v1660
          %1706 = vmatprep.subr.mxu0 0.0
          %1707 = vmatpush1.msra.mxu0 %v1661
          %1708 = vmatprep.subr.mxu0 0.0
          %1709 = vmatpush1.msra.mxu0 %v1662
          %1710 = vmatprep.subr.mxu0 0.0
          %1711 = vmatpush1.msra.mxu0 %v1663
          %1712 = vmatprep.subr.mxu0 0.0
          %1713 = vmatpush1.msra.mxu0 0.0
          %1714 = vmatprep.subr.mxu0 0.0
          %1715 = vmatpush1.msra.mxu0 0.0
          %1716 = vmatprep.subr.mxu0 0.0
          %1717 = vmatpush1.msra.mxu0 0.0
          %1718 = vmatprep.subr.mxu0 0.0
          %1719 = vmatpush1.msra.mxu0 0.0
          %1720 = vmatprep.subr.mxu0 0.0
          %1721 = vmatpush1.msra.mxu0 0.0
          %1722 = vmatprep.subr.mxu0 0.0
          %1723 = vmatpush1.msra.mxu0 0.0
          %1724 = vmatprep.subr.mxu0 0.0
          %1725 = vmatpush1.msra.mxu0 0.0
          %1726 = vmatprep.subr.mxu0 0.0
          %1727 = vmatpush1.msra.mxu0 0.0
          %1728 = vmatprep.subr.mxu0 0.0
          %1729 = vmatpush1.msra.mxu0 0.0
          %1730 = vmatprep.subr.mxu0 0.0
          %1731 = vmatpush1.msra.mxu0 0.0
          %1732 = vmatprep.subr.mxu0 0.0
          %1733 = vmatpush1.msra.mxu0 0.0
          %1734 = vmatprep.subr.mxu0 0.0
          %1735 = vmatpush1.msra.mxu0 0.0
          %1736 = vmatprep.subr.mxu0 0.0
          %1737 = vmatpush1.msra.mxu0 0.0
          %1738 = vmatprep.subr.mxu0 0.0
          %1739 = vmatpush1.msra.mxu0 0.0
          %1740 = vmatprep.subr.mxu0 0.0
          %1741 = vmatpush1.msra.mxu0 0.0
          %1742 = vmatprep.subr.mxu0 0.0
          %1743 = vmatpush1.msra.mxu0 0.0
          %1744 = vmatprep.mubr.f32.mxu0 0.0
          %1745 = vmatmul.mubr.f32.gmra.mrb[0].mxu0 %v1632
          %v1746 = vpop.f32.mrb[0].mxu0
          %v1747 = vadd.f32 %v1664, %v1746
          %v1748 = vpop.f32.mrb[0].mxu0
          %1749 = vmatprep.mubr.f32.mxu0 0.0
          %1750 = vmatmul.mubr.f32.gmra.mrb[0].mxu0 %v1633
          %v1751 = vpop.f32.mrb[0].mxu0
          %v1752 = vadd.f32 %v1665, %v1751
          %v1753 = vpop.f32.mrb[0].mxu0
          %1754 = vmatprep.mubr.f32.mxu0 0.0
          %1755 = vmatmul.mubr.f32.gmra.mrb[0].mxu0 %v1634
          %v1756 = vpop.f32.mrb[0].mxu0
          %v1757 = vadd.f32 %v1666, %v1756
          %v1758 = vpop.f32.mrb[0].mxu0
          %1759 = vmatprep.mubr.f32.mxu0 0.0
          %1760 = vmatmul.mubr.f32.gmra.mrb[0].mxu0 %v1635
          %v1761 = vpop.f32.mrb[0].mxu0
          %v1762 = vadd.f32 %v1667, %v1761
          %v1763 = vpop.f32.mrb[0].mxu0
          %1764 = vmatprep.mubr.f32.mxu0 0.0
          %1765 = vmatmul.mubr.f32.gmra.mrb[0].mxu0 %v1636
          %v1766 = vpop.f32.mrb[0].mxu0
          %v1767 = vadd.f32 %v1668, %v1766
          %v1768 = vpop.f32.mrb[0].mxu0
          %1769 = vmatprep.mubr.f32.mxu0 0.0
          %1770 = vmatmul.mubr.f32.gmra.mrb[0].mxu0 %v1637
          %v1771 = vpop.f32.mrb[0].mxu0
          %v1772 = vadd.f32 %v1669, %v1771
          %v1773 = vpop.f32.mrb[0].mxu0
          %1774 = vmatprep.mubr.f32.mxu0 0.0
          %1775 = vmatmul.mubr.f32.gmra.mrb[0].mxu0 %v1638
          %v1776 = vpop.f32.mrb[0].mxu0
          %v1777 = vadd.f32 %v1670, %v1776
          %v1778 = vpop.f32.mrb[0].mxu0
          %1779 = vmatprep.mubr.f32.mxu0 0.0
          %1780 = vmatmul.mubr.f32.gmra.mrb[0].mxu0 %v1639
          %v1781 = vpop.f32.mrb[0].mxu0
          %v1782 = vadd.f32 %v1671, %v1781
          %v1783 = vpop.f32.mrb[0].mxu0
          %1784 = vmatprep.mubr.f32.mxu0 0.0
          %1785 = vmatmul.mubr.f32.gmra.mrb[0].mxu0 %v1640
          %v1786 = vpop.f32.mrb[0].mxu0
          %v1787 = vadd.f32 %v1672, %v1786
          %v1788 = vpop.f32.mrb[0].mxu0
          %1789 = vmatprep.mubr.f32.mxu0 0.0
          %1790 = vmatmul.mubr.f32.gmra.mrb[0].mxu0 %v1641
          %v1791 = vpop.f32.mrb[0].mxu0
          %v1792 = vadd.f32 %v1673, %v1791
          %v1793 = vpop.f32.mrb[0].mxu0
          %1794 = vmatprep.mubr.f32.mxu0 0.0
          %1795 = vmatmul.mubr.f32.gmra.mrb[0].mxu0 %v1642
          %v1796 = vpop.f32.mrb[0].mxu0
          %v1797 = vadd.f32 %v1674, %v1796
          %v1798 = vpop.f32.mrb[0].mxu0
          %1799 = vmatprep.mubr.f32.mxu0 0.0
          %1800 = vmatmul.mubr.f32.gmra.mrb[0].mxu0 %v1643
          %v1801 = vpop.f32.mrb[0].mxu0
          %v1802 = vadd.f32 %v1675, %v1801
          %v1803 = vpop.f32.mrb[0].mxu0
          %1804 = vmatprep.mubr.f32.mxu0 0.0
          %1805 = vmatmul.mubr.f32.gmra.mrb[0].mxu0 %v1644
          %v1806 = vpop.f32.mrb[0].mxu0
          %v1807 = vadd.f32 %v1676, %v1806
          %v1808 = vpop.f32.mrb[0].mxu0
          %1809 = vmatprep.mubr.f32.mxu0 0.0
          %1810 = vmatmul.mubr.f32.gmra.mrb[0].mxu0 %v1645
          %v1811 = vpop.f32.mrb[0].mxu0
          %v1812 = vadd.f32 %v1677, %v1811
          %v1813 = vpop.f32.mrb[0].mxu0
          %1814 = vmatprep.mubr.f32.mxu0 0.0
          %1815 = vmatmul.mubr.f32.gmra.mrb[0].mxu0 %v1646
          %v1816 = vpop.f32.mrb[0].mxu0
          %v1817 = vadd.f32 %v1678, %v1816
          %v1818 = vpop.f32.mrb[0].mxu0
          %1819 = vmatprep.mubr.f32.mxu0 0.0
          %1820 = vmatmul.mubr.f32.gmra.mrb[0].mxu0 %v1647
          %v1821 = vpop.f32.mrb[0].mxu0
          %v1822 = vadd.f32 %v1679, %v1821
          %v1823 = vpop.f32.mrb[0].mxu0
          %1824 = vdwg.mxu0
          %v1825 = vmax.f32 %v1747, 0.0
          %v1826 = vmax.f32 %v1752, 0.0
          %v1827 = vmax.f32 %v1757, 0.0
          %v1828 = vmax.f32 %v1762, 0.0
          %v1829 = vmax.f32 %v1767, 0.0
          %v1830 = vmax.f32 %v1772, 0.0
          %v1831 = vmax.f32 %v1777, 0.0
          %v1832 = vmax.f32 %v1782, 0.0
          %v1833 = vmax.f32 %v1787, 0.0
          %v1834 = vmax.f32 %v1792, 0.0
          %v1835 = vmax.f32 %v1797, 0.0
          %v1836 = vmax.f32 %v1802, 0.0
          %v1837 = vmax.f32 %v1807, 0.0
          %v1838 = vmax.f32 %v1812, 0.0
          %v1839 = vmax.f32 %v1817, 0.0
          %v1840 = vmax.f32 %v1822, 0.0
          %1841 = vst [vmem:[%s519] sm:$0xff] %v1825
          %1842 = vst [vmem:[%s519 + $0x8] sm:$0xff] %v1826
          %1843 = vst [vmem:[%s519 + $0x10] sm:$0xff] %v1827
          %1844 = vst [vmem:[%s519 + $0x18] sm:$0xff] %v1828
          %1845 = vst [vmem:[%s519 + $0x20] sm:$0xff] %v1829
          %1846 = vst [vmem:[%s519 + $0x28] sm:$0xff] %v1830
          %1847 = vst [vmem:[%s519 + $0x30] sm:$0xff] %v1831
          %1848 = vst [vmem:[%s519 + $0x38] sm:$0xff] %v1832
          %1849 = vst [vmem:[%s519 + $0x40] sm:$0xff] %v1833
          %1850 = vst [vmem:[%s519 + $0x48] sm:$0xff] %v1834
          %1851 = vst [vmem:[%s519 + $0x50] sm:$0xff] %v1835
          %1852 = vst [vmem:[%s519 + $0x58] sm:$0xff] %v1836
          %1853 = vst [vmem:[%s519 + $0x60] sm:$0xff] %v1837
          %1854 = vst [vmem:[%s519 + $0x68] sm:$0xff] %v1838
          %1855 = vst [vmem:[%s519 + $0x70] sm:$0xff] %v1839
          %1856 = vst [vmem:[%s519 + $0x78] sm:$0xff] %v1840
        $region84: #{gcn_forward.1} parent=47 // pred_fallthru
          _
        %s1857 = sand.u32 %s232, 1
        %s1858 = scalar_lea.sflag [#allocation6], %s1857
        %s1859 = sand.u32 %s232, 1
        %s1860 = smul.addr %s1859, 128
        %s1861 = scalar_lea.vmem [#allocation16], %s1860
        // Predicated region
        $region85: #{gcn_forward.1} parent=47 // pred_check
          %p1862 = pneg %p242
        $region86: #{gcn_forward.1} parent=47 // pred_check_branch
          %1864 = sbr.rel (%p1862) target = $region88
        $region87: #{gcn_forward.1} parent=47 // pred_region
          %s1865 = smul.u32 16, %s37
          %s1867 = ssub.s32 2048, 2048
          %1868 = vsyncadd %s1858, %s1867
          %s1869 = smul.addr %s1865, 128
          %s1870 = scalar_lea.hbm %s7, %s1869
          %s1871 = sshll.u32 %s1861, 4
          %s1872 = int_to_ptr.vmem [resolvable:$true] %s1871
          %1877 = dma.vmem_to_hbm [thread:$0]  %s1872, 2048, %s1870, %s1858, 128, 128, 8
        $region88: #{gcn_forward.1} parent=47 // pred_fallthru
          _
      $region48: #{gcn_forward.1} parent=5 // pred_fallthru
        _
      %p1878 = scmp.le.s32.totalorder 2, %s28
      // Predicated region
      $region89: #{gcn_forward.1} parent=5 // pred_check
        %p1879 = pneg %p1878
      $region90: #{gcn_forward.1} parent=5 // pred_check_branch
        %1881 = sbr.rel (%p1879) target = $region92
      $region91: #{gcn_forward.1} parent=5 // pred_region
        %s1882 = ssub.s32 %s28, 2
        // Predicated region
        $region93: #{gcn_forward.1} parent=91 // pred_check
          %p1883 = pneg %p248
        $region94: #{gcn_forward.1} parent=91 // pred_check_branch
          %1885 = sbr.rel (%p1883) target = $region96
        $region95: #{gcn_forward.1} parent=91 // pred_region
          %s1886 = sand.u32 %s233, 1
          %s1887 = scalar_lea.sflag [#allocation6], %s1886
          %s1888 = sand.u32 %s233, 1
          %s1889 = smul.addr %s1888, 128
          %s1890 = scalar_lea.vmem [#allocation16], %s1889
          %1891 = dma.done %s1887, 2048
        $region96: #{gcn_forward.1} parent=91 // pred_fallthru
          _
      $region92: #{gcn_forward.1} parent=5 // pred_fallthru
        _
    $region6: #{gcn_forward.1} parent=1 // loop_footer
      %s32 = sadd.s32 1, %s28
    $region7: #{gcn_forward.1} parent=1 // loop_footer_branch
      %27 = sbr.rel target = $region3
    $region8: #{gcn_forward.1} parent=1 // loop_exit
      _
    %1892 = vsyncpa [#allocation5], 1
    %s1893 = scalar_lea.sflag [#allocation5], 1
    %1894 = vsyncpa %s1893, 1
    %1895 = vsyncpa [#allocation8], 1
    %s1896 = scalar_lea.sflag [#allocation8], 1
    %1897 = vsyncpa %s1896, 1
    %1898 = vsyncpa [#allocation11], 1
    %s1899 = scalar_lea.sflag [#allocation11], 1
    %1900 = vsyncpa %s1899, 1
    %1901 = vsyncpa [#allocation14], 1
    %s1902 = scalar_lea.sflag [#allocation14], 1
    %1903 = vsyncpa %s1902, 1
    %1904 = vsyncpa [#allocation6], 1
    %s1905 = scalar_lea.sflag [#allocation6], 1
    %1906 = vsyncpa %s1905, 1

</llo_original>
